<compile_context>
chip_gen: v7x
topology: tpu7x:2x2x1
jax: 0.10.0
libtpu: 0.0.40
codegen_flags: <defaults>
</compile_context>

<pallas_src>
import jax
import jax.numpy as jnp
from jax import lax
from jax.experimental import pallas as pl
from jax.experimental.pallas import tpu as pltpu

HEADS = 4
REDUCE = 4
LN_EPS = 1e-5          # PyTorch LayerNorm default eps
LANE = 128             # TPU lane width; output channels padded to a multiple of this

# MXU operand dtype: f32 keeps the allclose check tight at these tiny shapes.
# On v5e/v6e/v7x set to jnp.bfloat16 (accumulation stays f32 via preferred_element_type).
MXU_DTYPE = jnp.float32


def _mm(a, b):
    return jnp.dot(a.astype(MXU_DTYPE), b.astype(MXU_DTYPE),
                   preferred_element_type=jnp.float32)


def _bmm(spec, a, b):
    return jnp.einsum(spec, a.astype(MXU_DTYPE), b.astype(MXU_DTYPE),
                      preferred_element_type=jnp.float32)


def _layernorm(x, g, b):
    mu = jnp.mean(x, axis=-1, keepdims=True)
    var = jnp.mean((x - mu) ** 2, axis=-1, keepdims=True)
    return (x - mu) * lax.rsqrt(var + LN_EPS) * g + b


def relate_mlp(x, part_fea, params):
    B, L, in_dim = x.shape
    _, L2, part_dim = part_fea.shape
    H = params["inW"].shape[1]
    HR = params["qW"].shape[1]           # H // REDUCE
    ffn_dim = params["f1W"].shape[1]
    out_dim = params["outW"].shape[1]

    dim_head = H // HEADS
    dhr = dim_head // REDUCE
    scale = dim_head ** -0.5
    N, M, G = B * L, B * L2, HEADS * B

    # ---- pack parameters into two slabs (wrapper side, plain XLA) -------------
    RMAX = -(-max(in_dim, part_dim, H, ffn_dim) // 8) * 8
    CMAX = -(-max(H, HR, ffn_dim, out_dim, LANE) // LANE) * LANE
    OUTP = -(-out_dim // LANE) * LANE    # lane-dense (padded) output width
    assert OUTP <= CMAX

    def pad2(a, r, c):
        a = a.astype(jnp.float32)
        return jnp.pad(a, ((0, r - a.shape[0]), (0, c - a.shape[1])))

    w_names = ["inW", "partW", "qW", "kW", "vW", "f1W", "f2W", "outW"]
    Wpack = jnp.stack([pad2(params[n], RMAX, CMAX) for n in w_names])        # (8, RMAX, CMAX)

    vec_names = ["inb", "partb", "qb", "kb", "vb", "ln1g", "ln1b",
                 "f1b", "f2b", "ln2g", "ln2b", "outb"]
    Vpack = jnp.concatenate([pad2(params[n].reshape(1, -1), 1, CMAX)
                             for n in vec_names], axis=0)                     # (12, CMAX)

    # ---- kernel (closure over the static dims) --------------------------------
    def kernel(x_ref, pf_ref, w_ref, vec_ref, o_ref):
        xin = x_ref[...].reshape(N, in_dim)
        pin = pf_ref[...].reshape(M, part_dim)

        # static slices of the packed slabs (zero-cost views)
        inW = w_ref[0, :in_dim, :H]
        partW = w_ref[1, :part_dim, :H]
        qW = w_ref[2, :H, :HR]
        kW = w_ref[3, :H, :HR]
        vW = w_ref[4, :H, :H]
        f1W = w_ref[5, :H, :ffn_dim]
        f2W = w_ref[6, :ffn_dim, :H]
        outW = w_ref[7, :H, :OUTP]

        inb = vec_ref[0:1, :H]
        partb = vec_ref[1:2, :H]
        qb = vec_ref[2:3, :HR]
        kb = vec_ref[3:4, :HR]
        vb = vec_ref[4:5, :H]
        ln1g = vec_ref[5:6, :H]
        ln1b = vec_ref[6:7, :H]
        f1b = vec_ref[7:8, :ffn_dim]
        f2b = vec_ref[8:9, :H]
        ln2g = vec_ref[9:10, :H]
        ln2b = vec_ref[10:11, :H]
        outb = vec_ref[11:12, :OUTP]

        # RelateMLP input projections
        h = _mm(xin, inW) + inb                       # (N, H)
        p = _mm(pin, partW) + partb                   # (M, H)

        # CrossAttLayer q/k/v projections (single full-width matmuls)
        q = (_mm(h, qW) + qb) * scale                 # (N, HR)
        k = _mm(p, kW) + kb                           # (M, HR)
        v = _mm(p, vW) + vb                           # (M, H)

        # regroup (head, batch) pairs onto a leading group axis g = head*B + b
        q3 = q.reshape(B, L, HR)
        k3 = k.reshape(B, L2, HR)
        v3 = v.reshape(B, L2, H)
        qg = jnp.concatenate([q3[:, :, i * dhr:(i + 1) * dhr] for i in range(HEADS)], axis=0)
        kg = jnp.concatenate([k3[:, :, i * dhr:(i + 1) * dhr] for i in range(HEADS)], axis=0)
        vg = jnp.concatenate([v3[:, :, i * dim_head:(i + 1) * dim_head] for i in range(HEADS)], axis=0)

        # batched attention: 2 MXU einsums over all (head, batch) groups
        s = _bmm("gqd,gkd->gqk", qg, kg)              # (G, L, L2)
        s = s - jnp.max(s, axis=-1, keepdims=True)
        e = jnp.exp(s)
        att = e * pl.reciprocal(jnp.sum(e, axis=-1, keepdims=True), approx=True)
        og = _bmm("gqk,gkd->gqd", att, vg)            # (G, L, dim_head)

        # merge heads back onto the channel axis: (B, L, H) -> (N, H)
        attn = jnp.concatenate([og[i * B:(i + 1) * B] for i in range(HEADS)], axis=-1)
        attn = attn.reshape(N, H)

        # residual + LN1
        x1 = _layernorm(h + attn, ln1g, ln1b)

        # FFN (dropout p=0.0 -> identity), residual + LN2
        f = jnp.maximum(_mm(x1, f1W) + f1b, 0.0)
        f = _mm(f, f2W) + f2b
        x2 = _layernorm(x1 + f, ln2g, ln2b)

        # RelateMLP tail: out_layer(relu(x)); lane-dense (padded) output columns
        o_ref[...] = (_mm(jnp.maximum(x2, 0.0), outW) + outb).astype(o_ref.dtype)

    out_flat = pl.pallas_call(
        kernel,
        out_shape=jax.ShapeDtypeStruct((N, OUTP), jnp.float32),
        grid_spec=pltpu.PrefetchScalarGridSpec(
            num_scalar_prefetch=0,
            grid=(1,),                                 # whole problem in one step
            in_specs=[
                pl.BlockSpec((B, L, in_dim), lambda i: (0, 0, 0)),
                pl.BlockSpec((B, L2, part_dim), lambda i: (0, 0, 0)),
                pl.BlockSpec(Wpack.shape, lambda i: (0, 0, 0)),
                pl.BlockSpec(Vpack.shape, lambda i: (0, 0)),
            ],
            out_specs=pl.BlockSpec((N, OUTP), lambda i: (0, 0)),
        ),
        compiler_params=pltpu.CompilerParams(
            dimension_semantics=("arbitrary",)),
    )(x, part_fea, Wpack, Vpack)

    return out_flat[:, :out_dim].reshape(B, L, out_dim)


def make_params(key, in_dim, part_dim, hidden_dim, out_dim):
    """Deterministic synthetic parameters. Biases / LN params stored as (1, D);
    Linear weights stored as (in_features, out_features)."""
    ks = jax.random.split(key, 16)
    H = hidden_dim
    ffn_dim = 2 * H

    def lin(k, fan_in, fan_out):
        return (jax.random.normal(k, (fan_in, fan_out), jnp.float32) / jnp.sqrt(fan_in)).astype(jnp.float32)

    return {
        "inW":   lin(ks[0], in_dim, H),      "inb":   jnp.zeros((1, H), jnp.float32) + 0.01,
        "partW": lin(ks[1], part_dim, H),    "partb": jnp.zeros((1, H), jnp.float32) + 0.02,
        "qW":    lin(ks[2], H, H // REDUCE), "qb":    jnp.zeros((1, H // REDUCE), jnp.float32),
        "kW":    lin(ks[3], H, H // REDUCE), "kb":    jnp.zeros((1, H // REDUCE), jnp.float32),
        "vW":    lin(ks[4], H, H),           "vb":    jnp.zeros((1, H), jnp.float32),
        "ln1g":  jnp.ones((1, H), jnp.float32),  "ln1b": jnp.zeros((1, H), jnp.float32),
        "f1W":   lin(ks[5], H, ffn_dim),     "f1b":   jnp.zeros((1, ffn_dim), jnp.float32) + 0.03,
        "f2W":   lin(ks[6], ffn_dim, H),     "f2b":   jnp.zeros((1, H), jnp.float32) + 0.04,
        "ln2g":  jnp.ones((1, H), jnp.float32),  "ln2b": jnp.zeros((1, H), jnp.float32),
        "outW":  lin(ks[7], H, out_dim),     "outb":  jnp.zeros((1, out_dim), jnp.float32) + 0.05,
    }


def relate_mlp_reference(x, pf, p):
    """Pure-JAX reference mirroring the PyTorch forward (n_layers=3 -> one CrossAttLayer)."""
    h = x @ p["inW"] + p["inb"]
    pt = pf @ p["partW"] + p["partb"]
    B, L, H = h.shape
    L2 = pt.shape[1]
    dim_head = H // HEADS
    dhr = dim_head // REDUCE
    q = (h @ p["qW"] + p["qb"]).reshape(B, L, HEADS, dhr).transpose(0, 2, 1, 3)
    k = (pt @ p["kW"] + p["kb"]).reshape(B, L2, HEADS, dhr).transpose(0, 2, 1, 3)
    v = (pt @ p["vW"] + p["vb"]).reshape(B, L2, HEADS, dim_head).transpose(0, 2, 1, 3)
    att = jax.nn.softmax((q * dim_head ** -0.5) @ k.transpose(0, 1, 3, 2), axis=-1)
    o = (att @ v).transpose(0, 2, 1, 3).reshape(B, L, H)

    def ln(z, g, b):
        mu = z.mean(-1, keepdims=True)
        var = ((z - mu) ** 2).mean(-1, keepdims=True)
        return (z - mu) / jnp.sqrt(var + LN_EPS) * g + b

    x1 = ln(h + o, p["ln1g"], p["ln1b"])
    f = jnp.maximum(x1 @ p["f1W"] + p["f1b"], 0.0) @ p["f2W"] + p["f2b"]
    x2 = ln(x1 + f, p["ln2g"], p["ln2b"])
    return jnp.maximum(x2, 0.0) @ p["outW"] + p["outb"]


if __name__ == "__main__":
    B, L, L2 = 2, 16, 8
    in_dim, part_dim, hidden_dim, out_dim = 16, 8, 32, 4   # n_layers=3 -> 1 CrossAttLayer

    key = jax.random.PRNGKey(0)
    kx, kp, kw = jax.random.split(key, 3)
    x = jax.random.normal(kx, (B, L, in_dim), jnp.float32)
    part_fea = jax.random.normal(kp, (B, L2, part_dim), jnp.float32)
    params = make_params(kw, in_dim, part_dim, hidden_dim, out_dim)

    out = jax.block_until_ready(relate_mlp(x, part_fea, params))
    ref = relate_mlp_reference(x, part_fea, params)
    assert out.shape == (B, L, out_dim)
    # approx (EUP) reciprocal in the softmax -> slightly looser tolerance than exact f32
    assert jnp.allclose(out, ref, rtol=2e-3, atol=2e-3), "mismatch vs pure-JAX reference"
    print("KERNEL_OK")
</pallas_src>

<mosaic_0001>
module attributes {stable_mosaic.version = 11 : i64} {
  func.func @kernel(%arg0: i32, %arg1: memref<2x16x16xf32, #tpu.memory_space<vmem>>, %arg2: memref<2x8x8xf32, #tpu.memory_space<vmem>>, %arg3: memref<8x64x128xf32, #tpu.memory_space<vmem>>, %arg4: memref<12x128xf32, #tpu.memory_space<vmem>>, %arg5: memref<32x128xf32, #tpu.memory_space<vmem>>) attributes {dimension_semantics = [#tpu.dimension_semantics<arbitrary>], iteration_bounds = array<i64: 1>, scalar_prefetch = 0 : i64, scratch_operands = 0 : i64, tpu.core_type = #tpu.core_type<tc>, window_params = [{pipeline_mode = #tpu.pipeline_mode<synchronous>, transform_indices = @transform_0, window_bounds = array<i64: 2, 16, 16>}, {pipeline_mode = #tpu.pipeline_mode<synchronous>, transform_indices = @transform_1, window_bounds = array<i64: 2, 8, 8>}, {pipeline_mode = #tpu.pipeline_mode<synchronous>, transform_indices = @transform_2, window_bounds = array<i64: 8, 64, 128>}, {pipeline_mode = #tpu.pipeline_mode<synchronous>, transform_indices = @transform_3, window_bounds = array<i64: 12, 128>}, {pipeline_mode = #tpu.pipeline_mode<synchronous>, transform_indices = @transform_4, window_bounds = array<i64: 32, 128>}]} {
    %c0 = arith.constant 0 : index
    %c0_0 = arith.constant 0 : index
    %c0_1 = arith.constant 0 : index
    %0 = vector.load %arg1[%c0, %c0_0, %c0_1] : memref<2x16x16xf32, #tpu.memory_space<vmem>>, vector<2x16x16xf32>
    %1 = vector.shape_cast %0 : vector<2x16x16xf32> to vector<32x16xf32>
    %c0_2 = arith.constant 0 : index
    %c0_3 = arith.constant 0 : index
    %c0_4 = arith.constant 0 : index
    %2 = vector.load %arg2[%c0_2, %c0_3, %c0_4] : memref<2x8x8xf32, #tpu.memory_space<vmem>>, vector<2x8x8xf32>
    %3 = vector.shape_cast %2 : vector<2x8x8xf32> to vector<16x8xf32>
    %c0_5 = arith.constant 0 : index
    %c0_6 = arith.constant 0 : index
    %c0_7 = arith.constant 0 : index
    %4 = vector.load %arg3[%c0_5, %c0_6, %c0_7] : memref<8x64x128xf32, #tpu.memory_space<vmem>>, vector<1x16x32xf32>
    %5 = vector.shape_cast %4 : vector<1x16x32xf32> to vector<16x32xf32>
    %c1 = arith.constant 1 : index
    %c0_8 = arith.constant 0 : index
    %c0_9 = arith.constant 0 : index
    %6 = vector.load %arg3[%c1, %c0_8, %c0_9] : memref<8x64x128xf32, #tpu.memory_space<vmem>>, vector<1x8x32xf32>
    %7 = vector.shape_cast %6 : vector<1x8x32xf32> to vector<8x32xf32>
    %c2 = arith.constant 2 : index
    %c0_10 = arith.constant 0 : index
    %c0_11 = arith.constant 0 : index
    %8 = vector.load %arg3[%c2, %c0_10, %c0_11] : memref<8x64x128xf32, #tpu.memory_space<vmem>>, vector<1x32x8xf32>
    %9 = vector.shape_cast %8 : vector<1x32x8xf32> to vector<32x8xf32>
    %c3 = arith.constant 3 : index
    %c0_12 = arith.constant 0 : index
    %c0_13 = arith.constant 0 : index
    %10 = vector.load %arg3[%c3, %c0_12, %c0_13] : memref<8x64x128xf32, #tpu.memory_space<vmem>>, vector<1x32x8xf32>
    %11 = vector.shape_cast %10 : vector<1x32x8xf32> to vector<32x8xf32>
    %c4 = arith.constant 4 : index
    %c0_14 = arith.constant 0 : index
    %c0_15 = arith.constant 0 : index
    %12 = vector.load %arg3[%c4, %c0_14, %c0_15] : memref<8x64x128xf32, #tpu.memory_space<vmem>>, vector<1x32x32xf32>
    %13 = vector.shape_cast %12 : vector<1x32x32xf32> to vector<32x32xf32>
    %c5 = arith.constant 5 : index
    %c0_16 = arith.constant 0 : index
    %c0_17 = arith.constant 0 : index
    %14 = vector.load %arg3[%c5, %c0_16, %c0_17] : memref<8x64x128xf32, #tpu.memory_space<vmem>>, vector<1x32x64xf32>
    %15 = vector.shape_cast %14 : vector<1x32x64xf32> to vector<32x64xf32>
    %c6 = arith.constant 6 : index
    %c0_18 = arith.constant 0 : index
    %c0_19 = arith.constant 0 : index
    %16 = vector.load %arg3[%c6, %c0_18, %c0_19] : memref<8x64x128xf32, #tpu.memory_space<vmem>>, vector<1x64x32xf32>
    %17 = vector.shape_cast %16 : vector<1x64x32xf32> to vector<64x32xf32>
    %c7 = arith.constant 7 : index
    %c0_20 = arith.constant 0 : index
    %c0_21 = arith.constant 0 : index
    %18 = vector.load %arg3[%c7, %c0_20, %c0_21] : memref<8x64x128xf32, #tpu.memory_space<vmem>>, vector<1x32x128xf32>
    %19 = vector.shape_cast %18 : vector<1x32x128xf32> to vector<32x128xf32>
    %c0_22 = arith.constant 0 : index
    %c0_23 = arith.constant 0 : index
    %20 = vector.load %arg4[%c0_22, %c0_23] : memref<12x128xf32, #tpu.memory_space<vmem>>, vector<1x32xf32>
    %c1_24 = arith.constant 1 : index
    %c0_25 = arith.constant 0 : index
    %21 = vector.load %arg4[%c1_24, %c0_25] : memref<12x128xf32, #tpu.memory_space<vmem>>, vector<1x32xf32>
    %c2_26 = arith.constant 2 : index
    %c0_27 = arith.constant 0 : index
    %22 = vector.load %arg4[%c2_26, %c0_27] : memref<12x128xf32, #tpu.memory_space<vmem>>, vector<1x8xf32>
    %c3_28 = arith.constant 3 : index
    %c0_29 = arith.constant 0 : index
    %23 = vector.load %arg4[%c3_28, %c0_29] : memref<12x128xf32, #tpu.memory_space<vmem>>, vector<1x8xf32>
    %c4_30 = arith.constant 4 : index
    %c0_31 = arith.constant 0 : index
    %24 = vector.load %arg4[%c4_30, %c0_31] : memref<12x128xf32, #tpu.memory_space<vmem>>, vector<1x32xf32>
    %c5_32 = arith.constant 5 : index
    %c0_33 = arith.constant 0 : index
    %25 = vector.load %arg4[%c5_32, %c0_33] : memref<12x128xf32, #tpu.memory_space<vmem>>, vector<1x32xf32>
    %c6_34 = arith.constant 6 : index
    %c0_35 = arith.constant 0 : index
    %26 = vector.load %arg4[%c6_34, %c0_35] : memref<12x128xf32, #tpu.memory_space<vmem>>, vector<1x32xf32>
    %c7_36 = arith.constant 7 : index
    %c0_37 = arith.constant 0 : index
    %27 = vector.load %arg4[%c7_36, %c0_37] : memref<12x128xf32, #tpu.memory_space<vmem>>, vector<1x64xf32>
    %c8 = arith.constant 8 : index
    %c0_38 = arith.constant 0 : index
    %28 = vector.load %arg4[%c8, %c0_38] : memref<12x128xf32, #tpu.memory_space<vmem>>, vector<1x32xf32>
    %c9 = arith.constant 9 : index
    %c0_39 = arith.constant 0 : index
    %29 = vector.load %arg4[%c9, %c0_39] : memref<12x128xf32, #tpu.memory_space<vmem>>, vector<1x32xf32>
    %c10 = arith.constant 10 : index
    %c0_40 = arith.constant 0 : index
    %30 = vector.load %arg4[%c10, %c0_40] : memref<12x128xf32, #tpu.memory_space<vmem>>, vector<1x32xf32>
    %c11 = arith.constant 11 : index
    %c0_41 = arith.constant 0 : index
    %31 = vector.load %arg4[%c11, %c0_41] : memref<12x128xf32, #tpu.memory_space<vmem>>, vector<1x128xf32>
    %cst = arith.constant dense<0.000000e+00> : vector<32x32xf32>
    %32 = tpu.matmul %1, %5, %cst {dimension_numbers = #tpu.dot_dimension_numbers<[1], [0], [0], [1], [0, 0, 1, 1], [], []>} : vector<32x16xf32>, vector<16x32xf32>, vector<32x32xf32> -> vector<32x32xf32>
    %33 = vector.broadcast %20 : vector<1x32xf32> to vector<32x32xf32>
    %34 = arith.addf %32, %33 : vector<32x32xf32>
    %cst_42 = arith.constant dense<0.000000e+00> : vector<16x32xf32>
    %35 = tpu.matmul %3, %7, %cst_42 {dimension_numbers = #tpu.dot_dimension_numbers<[1], [0], [0], [1], [0, 0, 1, 1], [], []>} : vector<16x8xf32>, vector<8x32xf32>, vector<16x32xf32> -> vector<16x32xf32>
    %36 = vector.broadcast %21 : vector<1x32xf32> to vector<16x32xf32>
    %37 = arith.addf %35, %36 : vector<16x32xf32>
    %cst_43 = arith.constant dense<0.000000e+00> : vector<32x8xf32>
    %38 = tpu.matmul %34, %9, %cst_43 {dimension_numbers = #tpu.dot_dimension_numbers<[1], [0], [0], [1], [0, 0, 1, 1], [], []>} : vector<32x32xf32>, vector<32x8xf32>, vector<32x8xf32> -> vector<32x8xf32>
    %39 = vector.broadcast %22 : vector<1x8xf32> to vector<32x8xf32>
    %40 = arith.addf %38, %39 : vector<32x8xf32>
    %cst_44 = arith.constant 0.353553385 : f32
    %41 = vector.broadcast %cst_44 : f32 to vector<32x8xf32>
    %42 = arith.mulf %40, %41 : vector<32x8xf32>
    %cst_45 = arith.constant dense<0.000000e+00> : vector<16x8xf32>
    %43 = tpu.matmul %37, %11, %cst_45 {dimension_numbers = #tpu.dot_dimension_numbers<[1], [0], [0], [1], [0, 0, 1, 1], [], []>} : vector<16x32xf32>, vector<32x8xf32>, vector<16x8xf32> -> vector<16x8xf32>
    %44 = vector.broadcast %23 : vector<1x8xf32> to vector<16x8xf32>
    %45 = arith.addf %43, %44 : vector<16x8xf32>
    %cst_46 = arith.constant dense<0.000000e+00> : vector<16x32xf32>
    %46 = tpu.matmul %37, %13, %cst_46 {dimension_numbers = #tpu.dot_dimension_numbers<[1], [0], [0], [1], [0, 0, 1, 1], [], []>} : vector<16x32xf32>, vector<32x32xf32>, vector<16x32xf32> -> vector<16x32xf32>
    %47 = vector.broadcast %24 : vector<1x32xf32> to vector<16x32xf32>
    %48 = arith.addf %46, %47 : vector<16x32xf32>
    %49 = vector.shape_cast %42 : vector<32x8xf32> to vector<2x16x8xf32>
    %50 = vector.shape_cast %45 : vector<16x8xf32> to vector<2x8x8xf32>
    %51 = vector.shape_cast %48 : vector<16x32xf32> to vector<2x8x32xf32>
    %52 = vector.extract_strided_slice %49 {offsets = [0, 0, 0], sizes = [2, 16, 2], strides = [1, 1, 1]} : vector<2x16x8xf32> to vector<2x16x2xf32>
    %53 = vector.extract_strided_slice %49 {offsets = [0, 0, 2], sizes = [2, 16, 2], strides = [1, 1, 1]} : vector<2x16x8xf32> to vector<2x16x2xf32>
    %54 = vector.extract_strided_slice %49 {offsets = [0, 0, 4], sizes = [2, 16, 2], strides = [1, 1, 1]} : vector<2x16x8xf32> to vector<2x16x2xf32>
    %55 = vector.extract_strided_slice %49 {offsets = [0, 0, 6], sizes = [2, 16, 2], strides = [1, 1, 1]} : vector<2x16x8xf32> to vector<2x16x2xf32>
    %56 = tpu.concatenate %52, %53, %54, %55 in 0 : vector<2x16x2xf32>, vector<2x16x2xf32>, vector<2x16x2xf32>, vector<2x16x2xf32> -> vector<8x16x2xf32>
    %57 = vector.extract_strided_slice %50 {offsets = [0, 0, 0], sizes = [2, 8, 2], strides = [1, 1, 1]} : vector<2x8x8xf32> to vector<2x8x2xf32>
    %58 = vector.extract_strided_slice %50 {offsets = [0, 0, 2], sizes = [2, 8, 2], strides = [1, 1, 1]} : vector<2x8x8xf32> to vector<2x8x2xf32>
    %59 = vector.extract_strided_slice %50 {offsets = [0, 0, 4], sizes = [2, 8, 2], strides = [1, 1, 1]} : vector<2x8x8xf32> to vector<2x8x2xf32>
    %60 = vector.extract_strided_slice %50 {offsets = [0, 0, 6], sizes = [2, 8, 2], strides = [1, 1, 1]} : vector<2x8x8xf32> to vector<2x8x2xf32>
    %61 = tpu.concatenate %57, %58, %59, %60 in 0 : vector<2x8x2xf32>, vector<2x8x2xf32>, vector<2x8x2xf32>, vector<2x8x2xf32> -> vector<8x8x2xf32>
    %62 = vector.extract_strided_slice %51 {offsets = [0, 0, 0], sizes = [2, 8, 8], strides = [1, 1, 1]} : vector<2x8x32xf32> to vector<2x8x8xf32>
    %63 = vector.extract_strided_slice %51 {offsets = [0, 0, 8], sizes = [2, 8, 8], strides = [1, 1, 1]} : vector<2x8x32xf32> to vector<2x8x8xf32>
    %64 = vector.extract_strided_slice %51 {offsets = [0, 0, 16], sizes = [2, 8, 8], strides = [1, 1, 1]} : vector<2x8x32xf32> to vector<2x8x8xf32>
    %65 = vector.extract_strided_slice %51 {offsets = [0, 0, 24], sizes = [2, 8, 8], strides = [1, 1, 1]} : vector<2x8x32xf32> to vector<2x8x8xf32>
    %66 = tpu.concatenate %62, %63, %64, %65 in 0 : vector<2x8x8xf32>, vector<2x8x8xf32>, vector<2x8x8xf32>, vector<2x8x8xf32> -> vector<8x8x8xf32>
    "tpu.trace_start"() <{level = 10 : i32, message = "gqd,gkd->gqk"}> : () -> ()
    %cst_47 = arith.constant dense<0.000000e+00> : vector<8x16x8xf32>
    %67 = tpu.matmul %56, %61, %cst_47 {dimension_numbers = #tpu.dot_dimension_numbers<[2], [2], [1], [1], [0, 0, 0, 1, 1, 1], [0], [0]>} : vector<8x16x2xf32>, vector<8x8x2xf32>, vector<8x16x8xf32> -> vector<8x16x8xf32>
    "tpu.trace_stop"() : () -> ()
    %cst_48 = arith.constant dense<0xFF800000> : vector<8x16xf32>
    %68 = vector.multi_reduction <maximumf>, %67, %cst_48 [2] : vector<8x16x8xf32> to vector<8x16xf32>
    %69 = vector.shape_cast %68 : vector<8x16xf32> to vector<8x16x1xf32>
    %70 = vector.broadcast %69 : vector<8x16x1xf32> to vector<8x16x8xf32>
    %71 = arith.subf %67, %70 : vector<8x16x8xf32>
    %72 = math.exp %71 : vector<8x16x8xf32>
    %cst_49 = arith.constant dense<0.000000e+00> : vector<8x16xf32>
    %73 = vector.multi_reduction <add>, %72, %cst_49 [2] : vector<8x16x8xf32> to vector<8x16xf32>
    %74 = vector.shape_cast %73 : vector<8x16xf32> to vector<8x16x1xf32>
    %75 = tpu.reciprocal %74 {approx = true} : vector<8x16x1xf32> -> vector<8x16x1xf32>
    %76 = vector.broadcast %75 : vector<8x16x1xf32> to vector<8x16x8xf32>
    %77 = arith.mulf %72, %76 : vector<8x16x8xf32>
    "tpu.trace_start"() <{level = 10 : i32, message = "gqk,gkd->gqd"}> : () -> ()
    %cst_50 = arith.constant dense<0.000000e+00> : vector<8x16x8xf32>
    %78 = tpu.matmul %77, %66, %cst_50 {dimension_numbers = #tpu.dot_dimension_numbers<[2], [1], [1], [2], [0, 0, 0, 1, 1, 2], [0], [0]>} : vector<8x16x8xf32>, vector<8x8x8xf32>, vector<8x16x8xf32> -> vector<8x16x8xf32>
    "tpu.trace_stop"() : () -> ()
    %79 = vector.extract_strided_slice %78 {offsets = [0, 0, 0], sizes = [2, 16, 8], strides = [1, 1, 1]} : vector<8x16x8xf32> to vector<2x16x8xf32>
    %80 = vector.extract_strided_slice %78 {offsets = [2, 0, 0], sizes = [2, 16, 8], strides = [1, 1, 1]} : vector<8x16x8xf32> to vector<2x16x8xf32>
    %81 = vector.extract_strided_slice %78 {offsets = [4, 0, 0], sizes = [2, 16, 8], strides = [1, 1, 1]} : vector<8x16x8xf32> to vector<2x16x8xf32>
    %82 = vector.extract_strided_slice %78 {offsets = [6, 0, 0], sizes = [2, 16, 8], strides = [1, 1, 1]} : vector<8x16x8xf32> to vector<2x16x8xf32>
    %83 = tpu.concatenate %79, %80, %81, %82 in 2 : vector<2x16x8xf32>, vector<2x16x8xf32>, vector<2x16x8xf32>, vector<2x16x8xf32> -> vector<2x16x32xf32>
    %84 = vector.shape_cast %83 : vector<2x16x32xf32> to vector<32x32xf32>
    %85 = arith.addf %34, %84 : vector<32x32xf32>
    %cst_51 = arith.constant dense<0.000000e+00> : vector<32xf32>
    %86 = vector.multi_reduction <add>, %85, %cst_51 [1] : vector<32x32xf32> to vector<32xf32>
    %87 = vector.shape_cast %86 : vector<32xf32> to vector<32x1xf32>
    %cst_52 = arith.constant 3.200000e+01 : f32
    %88 = vector.broadcast %cst_52 : f32 to vector<32x1xf32>
    %89 = arith.divf %87, %88 : vector<32x1xf32>
    %90 = vector.broadcast %89 : vector<32x1xf32> to vector<32x32xf32>
    %91 = arith.subf %85, %90 : vector<32x32xf32>
    %92 = arith.mulf %91, %91 : vector<32x32xf32>
    %cst_53 = arith.constant dense<0.000000e+00> : vector<32xf32>
    %93 = vector.multi_reduction <add>, %92, %cst_53 [1] : vector<32x32xf32> to vector<32xf32>
    %94 = vector.shape_cast %93 : vector<32xf32> to vector<32x1xf32>
    %cst_54 = arith.constant 3.200000e+01 : f32
    %95 = vector.broadcast %cst_54 : f32 to vector<32x1xf32>
    %96 = arith.divf %94, %95 : vector<32x1xf32>
    %97 = vector.broadcast %89 : vector<32x1xf32> to vector<32x32xf32>
    %98 = arith.subf %85, %97 : vector<32x32xf32>
    %cst_55 = arith.constant 9.99999974E-6 : f32
    %99 = vector.broadcast %cst_55 : f32 to vector<32x1xf32>
    %100 = arith.addf %96, %99 : vector<32x1xf32>
    %101 = math.rsqrt %100 : vector<32x1xf32>
    %102 = vector.broadcast %101 : vector<32x1xf32> to vector<32x32xf32>
    %103 = arith.mulf %98, %102 : vector<32x32xf32>
    %104 = vector.broadcast %25 : vector<1x32xf32> to vector<32x32xf32>
    %105 = arith.mulf %103, %104 : vector<32x32xf32>
    %106 = vector.broadcast %26 : vector<1x32xf32> to vector<32x32xf32>
    %107 = arith.addf %105, %106 : vector<32x32xf32>
    %cst_56 = arith.constant dense<0.000000e+00> : vector<32x64xf32>
    %108 = tpu.matmul %107, %15, %cst_56 {dimension_numbers = #tpu.dot_dimension_numbers<[1], [0], [0], [1], [0, 0, 1, 1], [], []>} : vector<32x32xf32>, vector<32x64xf32>, vector<32x64xf32> -> vector<32x64xf32>
    %109 = vector.broadcast %27 : vector<1x64xf32> to vector<32x64xf32>
    %110 = arith.addf %108, %109 : vector<32x64xf32>
    %cst_57 = arith.constant 0.000000e+00 : f32
    %111 = vector.broadcast %cst_57 : f32 to vector<32x64xf32>
    %112 = arith.maximumf %110, %111 : vector<32x64xf32>
    %cst_58 = arith.constant dense<0.000000e+00> : vector<32x32xf32>
    %113 = tpu.matmul %112, %17, %cst_58 {dimension_numbers = #tpu.dot_dimension_numbers<[1], [0], [0], [1], [0, 0, 1, 1], [], []>} : vector<32x64xf32>, vector<64x32xf32>, vector<32x32xf32> -> vector<32x32xf32>
    %114 = vector.broadcast %28 : vector<1x32xf32> to vector<32x32xf32>
    %115 = arith.addf %113, %114 : vector<32x32xf32>
    %116 = arith.addf %107, %115 : vector<32x32xf32>
    %cst_59 = arith.constant dense<0.000000e+00> : vector<32xf32>
    %117 = vector.multi_reduction <add>, %116, %cst_59 [1] : vector<32x32xf32> to vector<32xf32>
    %118 = vector.shape_cast %117 : vector<32xf32> to vector<32x1xf32>
    %cst_60 = arith.constant 3.200000e+01 : f32
    %119 = vector.broadcast %cst_60 : f32 to vector<32x1xf32>
    %120 = arith.divf %118, %119 : vector<32x1xf32>
    %121 = vector.broadcast %120 : vector<32x1xf32> to vector<32x32xf32>
    %122 = arith.subf %116, %121 : vector<32x32xf32>
    %123 = arith.mulf %122, %122 : vector<32x32xf32>
    %cst_61 = arith.constant dense<0.000000e+00> : vector<32xf32>
    %124 = vector.multi_reduction <add>, %123, %cst_61 [1] : vector<32x32xf32> to vector<32xf32>
    %125 = vector.shape_cast %124 : vector<32xf32> to vector<32x1xf32>
    %cst_62 = arith.constant 3.200000e+01 : f32
    %126 = vector.broadcast %cst_62 : f32 to vector<32x1xf32>
    %127 = arith.divf %125, %126 : vector<32x1xf32>
    %128 = vector.broadcast %120 : vector<32x1xf32> to vector<32x32xf32>
    %129 = arith.subf %116, %128 : vector<32x32xf32>
    %cst_63 = arith.constant 9.99999974E-6 : f32
    %130 = vector.broadcast %cst_63 : f32 to vector<32x1xf32>
    %131 = arith.addf %127, %130 : vector<32x1xf32>
    %132 = math.rsqrt %131 : vector<32x1xf32>
    %133 = vector.broadcast %132 : vector<32x1xf32> to vector<32x32xf32>
    %134 = arith.mulf %129, %133 : vector<32x32xf32>
    %135 = vector.broadcast %29 : vector<1x32xf32> to vector<32x32xf32>
    %136 = arith.mulf %134, %135 : vector<32x32xf32>
    %137 = vector.broadcast %30 : vector<1x32xf32> to vector<32x32xf32>
    %138 = arith.addf %136, %137 : vector<32x32xf32>
    %cst_64 = arith.constant 0.000000e+00 : f32
    %139 = vector.broadcast %cst_64 : f32 to vector<32x32xf32>
    %140 = arith.maximumf %138, %139 : vector<32x32xf32>
    %cst_65 = arith.constant dense<0.000000e+00> : vector<32x128xf32>
    %141 = tpu.matmul %140, %19, %cst_65 {dimension_numbers = #tpu.dot_dimension_numbers<[1], [0], [0], [1], [0, 0, 1, 1], [], []>} : vector<32x32xf32>, vector<32x128xf32>, vector<32x128xf32> -> vector<32x128xf32>
    %142 = vector.broadcast %31 : vector<1x128xf32> to vector<32x128xf32>
    %143 = arith.addf %141, %142 : vector<32x128xf32>
    %c0_66 = arith.constant 0 : index
    %c0_67 = arith.constant 0 : index
    %144 = vector.load %arg5[%c0_66, %c0_67] : memref<32x128xf32, #tpu.memory_space<vmem>>, vector<32x128xf32>
    tpu.vector_store %arg5[%c0_66, %c0_67], %143 {strides = array<i32>} : memref<32x128xf32, #tpu.memory_space<vmem>>, vector<32x128xf32>,
    return
  }
  func.func @transform_0(%arg0: i32) -> (i32, i32, i32) {
    %c0_i32 = arith.constant 0 : i32
    %c0_i32_0 = arith.constant 0 : i32
    %c0_i32_1 = arith.constant 0 : i32
    %c0_i32_2 = arith.constant 0 : i32
    return %c0_i32, %c0_i32_0, %c0_i32_1 : i32, i32, i32
  }
  func.func @transform_1(%arg0: i32) -> (i32, i32, i32) {
    %c0_i32 = arith.constant 0 : i32
    %c0_i32_0 = arith.constant 0 : i32
    %c0_i32_1 = arith.constant 0 : i32
    %c0_i32_2 = arith.constant 0 : i32
    return %c0_i32, %c0_i32_0, %c0_i32_1 : i32, i32, i32
  }
  func.func @transform_2(%arg0: i32) -> (i32, i32, i32) {
    %c0_i32 = arith.constant 0 : i32
    %c0_i32_0 = arith.constant 0 : i32
    %c0_i32_1 = arith.constant 0 : i32
    %c0_i32_2 = arith.constant 0 : i32
    return %c0_i32, %c0_i32_0, %c0_i32_1 : i32, i32, i32
  }
  func.func @transform_3(%arg0: i32) -> (i32, i32) {
    %c0_i32 = arith.constant 0 : i32
    %c0_i32_0 = arith.constant 0 : i32
    %c0_i32_1 = arith.constant 0 : i32
    return %c0_i32, %c0_i32_0 : i32, i32
  }
  func.func @transform_4(%arg0: i32) -> (i32, i32) {
    %c0_i32 = arith.constant 0 : i32
    %c0_i32_0 = arith.constant 0 : i32
    %c0_i32_1 = arith.constant 0 : i32
    return %c0_i32, %c0_i32_0 : i32, i32
  }
}

</mosaic_0001>

<llo_original>
// kernel: tpu_custom_call.1
$region0: #{tpu_custom_call.1}
  #allocation0 [shape = 'u32[]', space=smem, size = 0x4, offset = 0x4, fixed_abs, tag = 'smem constant byte address 0x4 - core index']
  #allocation1 [shape = 'u32[144,128]{1,0:T(1,128)}', space=vmem, size = 0x12000, scoped, tag = 'internal scratch']
  %s0 = inlined_call_operand.hbm [shape: f32[2,16,16], index: 0, kind: input, shape index: {}]
  %s1 = inlined_call_operand.hbm [shape: f32[2,8,8], index: 1, kind: input, shape index: {}]
  %s2 = inlined_call_operand.hbm [shape: f32[8,64,128], index: 2, kind: input, shape index: {}]
  %s3 = inlined_call_operand.hbm [shape: f32[12,128], index: 3, kind: input, shape index: {}]
  %s4 = inlined_call_operand.hbm [shape: f32[32,128], index: 4, kind: output, shape index: {}]
  %s5 = sld [smem:[#allocation0]]
  $region42: #{tpu_custom_call.1} parent=0
    _
  %s7 = ssub.s32 1, %s5
  %s8 = scalar_select 0, %s7, %s5
  $region1: #{tpu_custom_call.1} parent=0
    #allocation2 [shape = 'u8[16384]{0}', space=vmem, size = 0x4000, scoped, tag = 'input window, operand 0, single buffered']
    #allocation3 [shape = 's32[1]{0}', space=sflag, size = 0x4, scoped, tag = 'scoped memory for tpu_custom_call.1']
    #allocation4 [shape = 's32[1]{0}', space=sflag, size = 0x4, scoped, tag = 'scoped memory for tpu_custom_call.1']
    #allocation5 [shape = 'u8[8192]{0}', space=vmem, size = 0x2000, scoped, tag = 'input window, operand 1, single buffered']
    #allocation6 [shape = 's32[1]{0}', space=sflag, size = 0x4, scoped, tag = 'scoped memory for tpu_custom_call.1']
    #allocation7 [shape = 'u8[262144]{0}', space=vmem, size = 0x40000, scoped, tag = 'input window, operand 2, single buffered']
    #allocation8 [shape = 'u8[8192]{0}', space=vmem, size = 0x2000, scoped, tag = 'input window, operand 3, single buffered']
    #allocation9 [shape = 's32[1]{0}', space=sflag, size = 0x4, scoped, tag = 'scoped memory for tpu_custom_call.1']
    #allocation10 [shape = 'u8[16384]{0}', space=vmem, size = 0x4000, scoped, tag = 'output window, operand 0, single buffered']
    %9 = vsyncpa [#allocation3], 0
    %10 = vsyncpa [#allocation6], 0
    %11 = vsyncpa [#allocation9], 0
    %12 = vsyncpa [#allocation4], 0
    // Predicated region
    $region2: #{tpu_custom_call.1} parent=1 // pred_check
      _
    $region3: #{tpu_custom_call.1} parent=1 // pred_check_branch
      %14 = sbr.rel (0) target = $region5
    $region4: #{tpu_custom_call.1} parent=1 // pred_region
      %s16 = ssub.s32 512, 512
      %17 = vsyncadd [#allocation3], %s16
      %s18 = sshll.u32 [#allocation2], 4
      %s19 = int_to_ptr.vmem [resolvable:$true] %s18
      %24 = dma.hbm_to_vmem [thread:$0]  %s0, 512, %s19, [#allocation3], 128, 128, 8
    $region5: #{tpu_custom_call.1} parent=1 // pred_fallthru
      _
    // Predicated region
    $region6: #{tpu_custom_call.1} parent=1 // pred_check
      _
    $region7: #{tpu_custom_call.1} parent=1 // pred_check_branch
      %26 = sbr.rel (0) target = $region9
    $region8: #{tpu_custom_call.1} parent=1 // pred_region
      %s28 = ssub.s32 256, 256
      %29 = vsyncadd [#allocation6], %s28
      %s30 = sshll.u32 [#allocation5], 4
      %s31 = int_to_ptr.vmem [resolvable:$true] %s30
      %36 = dma.hbm_to_vmem [thread:$0]  %s1, 256, %s31, [#allocation6], 128, 128, 8
    $region9: #{tpu_custom_call.1} parent=1 // pred_fallthru
      _
    // Predicated region
    $region10: #{tpu_custom_call.1} parent=1 // pred_check
      _
    $region11: #{tpu_custom_call.1} parent=1 // pred_check_branch
      %38 = sbr.rel (0) target = $region13
    $region12: #{tpu_custom_call.1} parent=1 // pred_region
      %s40 = ssub.s32 8192, 8192
      %41 = vsyncadd [#allocation6], %s40
      %s42 = sshll.u32 [#allocation7], 4
      %s43 = int_to_ptr.vmem [resolvable:$true] %s42
      %48 = dma.hbm_to_vmem [thread:$0]  %s2, 8192, %s43, [#allocation6], 128, 128, 8
    $region13: #{tpu_custom_call.1} parent=1 // pred_fallthru
      _
    // Predicated region
    $region14: #{tpu_custom_call.1} parent=1 // pred_check
      _
    $region15: #{tpu_custom_call.1} parent=1 // pred_check_branch
      %50 = sbr.rel (0) target = $region17
    $region16: #{tpu_custom_call.1} parent=1 // pred_region
      %s52 = ssub.s32 256, 256
      %53 = vsyncadd [#allocation9], %s52
      %s54 = sshll.u32 [#allocation8], 4
      %s55 = int_to_ptr.vmem [resolvable:$true] %s54
      %60 = dma.hbm_to_vmem [thread:$0]  %s3, 256, %s55, [#allocation9], 128, 128, 8
    $region17: #{tpu_custom_call.1} parent=1 // pred_fallthru
      _
    // Predicated region
    $region18: #{tpu_custom_call.1} parent=1 // pred_check
      _
    $region19: #{tpu_custom_call.1} parent=1 // pred_check_branch
      %62 = sbr.rel (0) target = $region21
    $region20: #{tpu_custom_call.1} parent=1 // pred_region
      %63 = dma.done [#allocation3], 512
    $region21: #{tpu_custom_call.1} parent=1 // pred_fallthru
      _
    // Predicated region
    $region22: #{tpu_custom_call.1} parent=1 // pred_check
      _
    $region23: #{tpu_custom_call.1} parent=1 // pred_check_branch
      %65 = sbr.rel (0) target = $region25
    $region24: #{tpu_custom_call.1} parent=1 // pred_region
      %66 = dma.done [#allocation6], 256
    $region25: #{tpu_custom_call.1} parent=1 // pred_fallthru
      _
    // Predicated region
    $region26: #{tpu_custom_call.1} parent=1 // pred_check
      _
    $region27: #{tpu_custom_call.1} parent=1 // pred_check_branch
      %68 = sbr.rel (0) target = $region29
    $region28: #{tpu_custom_call.1} parent=1 // pred_region
      %69 = dma.done [#allocation6], 8192
    $region29: #{tpu_custom_call.1} parent=1 // pred_fallthru
      _
    // Predicated region
    $region30: #{tpu_custom_call.1} parent=1 // pred_check
      _
    $region31: #{tpu_custom_call.1} parent=1 // pred_check_branch
      %71 = sbr.rel (0) target = $region33
    $region32: #{tpu_custom_call.1} parent=1 // pred_region
      %72 = dma.done [#allocation9], 256
    $region33: #{tpu_custom_call.1} parent=1 // pred_fallthru
      _
    %v73 = vld [vmem:[#allocation2] sm:$0xff]
    %v74 = vld [vmem:[#allocation2 + $0x8] sm:$0xff]
    %v75 = vld [vmem:[#allocation2 + $0x10] sm:$0xff]
    %v76 = vld [vmem:[#allocation2 + $0x18] sm:$0xff]
    %v77 = vld [vmem:[#allocation5] sm:$0xff]
    %v78 = vld [vmem:[#allocation5 + $0x8] sm:$0xff]
    %v79 = vld [vmem:[#allocation7] sm:$0xff]
    %v80 = vld [vmem:[#allocation7 + $0x8] sm:$0xff]
    %s81 = scalar_lea.vmem [#allocation7], 64
    %v82 = vld [vmem:[%s81] sm:$0xff]
    %s83 = scalar_lea.vmem [#allocation7], 128
    %v84 = vld [vmem:[%s83] sm:$0xff]
    %v85 = vld [vmem:[%s83 + $0x8] sm:$0xff]
    %v86 = vld [vmem:[%s83 + $0x10] sm:$0xff]
    %v87 = vld [vmem:[%s83 + $0x18] sm:$0xff]
    %s88 = scalar_lea.vmem [#allocation7], 192
    %v89 = vld [vmem:[%s88] sm:$0xff]
    %v90 = vld [vmem:[%s88 + $0x8] sm:$0xff]
    %v91 = vld [vmem:[%s88 + $0x10] sm:$0xff]
    %v92 = vld [vmem:[%s88 + $0x18] sm:$0xff]
    %s93 = scalar_lea.vmem [#allocation7], 256
    %v94 = vld [vmem:[%s93] sm:$0xff]
    %v95 = vld [vmem:[%s93 + $0x8] sm:$0xff]
    %v96 = vld [vmem:[%s93 + $0x10] sm:$0xff]
    %v97 = vld [vmem:[%s93 + $0x18] sm:$0xff]
    %s98 = scalar_lea.vmem [#allocation7], 320
    %v99 = vld [vmem:[%s98] sm:$0xff]
    %v100 = vld [vmem:[%s98 + $0x8] sm:$0xff]
    %v101 = vld [vmem:[%s98 + $0x10] sm:$0xff]
    %v102 = vld [vmem:[%s98 + $0x18] sm:$0xff]
    %s103 = scalar_lea.vmem [#allocation7], 384
    %v104 = vld [vmem:[%s103] sm:$0xff]
    %v105 = vld [vmem:[%s103 + $0x8] sm:$0xff]
    %v106 = vld [vmem:[%s103 + $0x10] sm:$0xff]
    %v107 = vld [vmem:[%s103 + $0x18] sm:$0xff]
    %v108 = vld [vmem:[%s103 + $0x20] sm:$0xff]
    %v109 = vld [vmem:[%s103 + $0x28] sm:$0xff]
    %v110 = vld [vmem:[%s103 + $0x30] sm:$0xff]
    %v111 = vld [vmem:[%s103 + $0x38] sm:$0xff]
    %s112 = scalar_lea.vmem [#allocation7], 448
    %v113 = vld [vmem:[%s112] sm:$0xff]
    %v114 = vld [vmem:[%s112 + $0x8] sm:$0xff]
    %v115 = vld [vmem:[%s112 + $0x10] sm:$0xff]
    %v116 = vld [vmem:[%s112 + $0x18] sm:$0xff]
    %v117 = vld [vmem:[#allocation8] sm:$0x1]
    %v118 = vld [vmem:[#allocation8 + $0x1] sm:$0x1]
    %v119 = vld [vmem:[#allocation8 + $0x2] sm:$0x1]
    %v120 = vld [vmem:[#allocation8 + $0x3] sm:$0x1]
    %v121 = vld [vmem:[#allocation8 + $0x4] sm:$0x1]
    %v122 = vld [vmem:[#allocation8 + $0x5] sm:$0x1]
    %v123 = vld [vmem:[#allocation8 + $0x6] sm:$0x1]
    %v124 = vld [vmem:[#allocation8 + $0x7] sm:$0x1]
    %v125 = vld [vmem:[#allocation8 + $0x8] sm:$0x1]
    %v126 = vld [vmem:[#allocation8 + $0x9] sm:$0x1]
    %v127 = vld [vmem:[#allocation8 + $0xa] sm:$0x1]
    %v128 = vld [vmem:[#allocation8 + $0xb] sm:$0x1]
    %v129 = vlaneseq
    %v130 = vshrl.u32 %v129, 7
    %v131 = vsub.s32 0, %v130
    %v132 = vrot.slane %v117, %v131
    %vm133 = vcmask 130048
    %v135 = vsel %vm133, %v73, 0
    %v138 = vsel %vm133, %v74, 0
    %v141 = vsel %vm133, %v75, 0
    %v144 = vsel %vm133, %v76, 0
    %146 = vmatprep.subr.mxu0 0.0
    %147 = vmatpush1.msra.mxu0 %v79
    %148 = vmatprep.subr.mxu0 0.0
    %149 = vmatpush1.msra.mxu0 %v80
    %150 = vmatprep.subr.mxu0 0.0
    %151 = vmatpush1.msra.mxu0 0.0
    %152 = vmatprep.subr.mxu0 0.0
    %153 = vmatpush1.msra.mxu0 0.0
    %154 = vmatprep.subr.mxu0 0.0
    %155 = vmatpush1.msra.mxu0 0.0
    %156 = vmatprep.subr.mxu0 0.0
    %157 = vmatpush1.msra.mxu0 0.0
    %158 = vmatprep.subr.mxu0 0.0
    %159 = vmatpush1.msra.mxu0 0.0
    %160 = vmatprep.subr.mxu0 0.0
    %161 = vmatpush1.msra.mxu0 0.0
    %162 = vmatprep.subr.mxu0 0.0
    %163 = vmatpush1.msra.mxu0 0.0
    %164 = vmatprep.subr.mxu0 0.0
    %165 = vmatpush1.msra.mxu0 0.0
    %166 = vmatprep.subr.mxu0 0.0
    %167 = vmatpush1.msra.mxu0 0.0
    %168 = vmatprep.subr.mxu0 0.0
    %169 = vmatpush1.msra.mxu0 0.0
    %170 = vmatprep.subr.mxu0 0.0
    %171 = vmatpush1.msra.mxu0 0.0
    %172 = vmatprep.subr.mxu0 0.0
    %173 = vmatpush1.msra.mxu0 0.0
    %174 = vmatprep.subr.mxu0 0.0
    %175 = vmatpush1.msra.mxu0 0.0
    %176 = vmatprep.subr.mxu0 0.0
    %177 = vmatpush1.msra.mxu0 0.0
    %178 = vmatprep.subr.mxu0 0.0
    %179 = vmatpush1.msra.mxu0 0.0
    %180 = vmatprep.subr.mxu0 0.0
    %181 = vmatpush1.msra.mxu0 0.0
    %182 = vmatprep.subr.mxu0 0.0
    %183 = vmatpush1.msra.mxu0 0.0
    %184 = vmatprep.subr.mxu0 0.0
    %185 = vmatpush1.msra.mxu0 0.0
    %186 = vmatprep.subr.mxu0 0.0
    %187 = vmatpush1.msra.mxu0 0.0
    %188 = vmatprep.subr.mxu0 0.0
    %189 = vmatpush1.msra.mxu0 0.0
    %190 = vmatprep.subr.mxu0 0.0
    %191 = vmatpush1.msra.mxu0 0.0
    %192 = vmatprep.subr.mxu0 0.0
    %193 = vmatpush1.msra.mxu0 0.0
    %194 = vmatprep.subr.mxu0 0.0
    %195 = vmatpush1.msra.mxu0 0.0
    %196 = vmatprep.subr.mxu0 0.0
    %197 = vmatpush1.msra.mxu0 0.0
    %198 = vmatprep.subr.mxu0 0.0
    %199 = vmatpush1.msra.mxu0 0.0
    %200 = vmatprep.subr.mxu0 0.0
    %201 = vmatpush1.msra.mxu0 0.0
    %202 = vmatprep.subr.mxu0 0.0
    %203 = vmatpush1.msra.mxu0 0.0
    %204 = vmatprep.subr.mxu0 0.0
    %205 = vmatpush1.msra.mxu0 0.0
    %206 = vmatprep.subr.mxu0 0.0
    %207 = vmatpush1.msra.mxu0 0.0
    %208 = vmatprep.subr.mxu0 0.0
    %209 = vmatpush1.msra.mxu0 0.0
    %210 = vmatprep.mubr.f32.mxu0 0.0
    %211 = vmatmul.mubr.f32.gmra.mrb[0].mxu0 %v135
    %v212 = vpop.f32.mrb[0].mxu0
    %v213 = vadd.f32 %v132, %v212
    %v214 = vpop.f32.mrb[0].mxu0
    %215 = vmatprep.mubr.f32.mxu0 0.0
    %216 = vmatmul.mubr.f32.gmra.mrb[0].mxu0 %v138
    %v217 = vpop.f32.mrb[0].mxu0
    %v218 = vadd.f32 %v132, %v217
    %v219 = vpop.f32.mrb[0].mxu0
    %220 = vmatprep.mubr.f32.mxu0 0.0
    %221 = vmatmul.mubr.f32.gmra.mrb[0].mxu0 %v141
    %v222 = vpop.f32.mrb[0].mxu0
    %v223 = vadd.f32 %v132, %v222
    %v224 = vpop.f32.mrb[0].mxu0
    %225 = vmatprep.mubr.f32.mxu0 0.0
    %226 = vmatmul.mubr.f32.gmra.mrb[0].mxu0 %v144
    %v227 = vpop.f32.mrb[0].mxu0
    %v228 = vadd.f32 %v132, %v227
    %v229 = vpop.f32.mrb[0].mxu0
    %230 = vdwg.mxu0
    %v231 = vlaneseq
    %v232 = vshrl.u32 %v231, 7
    %v233 = vsub.s32 0, %v232
    %v234 = vrot.slane %v118, %v233
    %vm235 = vcmask 64512
    %v237 = vsel %vm235, %v77, 0
    %v240 = vsel %vm235, %v78, 0
    %242 = vmatprep.subr.mxu0 0.0
    %243 = vmatpush1.msra.mxu0 %v82
    %244 = vmatprep.subr.mxu0 0.0
    %245 = vmatpush1.msra.mxu0 0.0
    %246 = vmatprep.subr.mxu0 0.0
    %247 = vmatpush1.msra.mxu0 0.0
    %248 = vmatprep.subr.mxu0 0.0
    %249 = vmatpush1.msra.mxu0 0.0
    %250 = vmatprep.subr.mxu0 0.0
    %251 = vmatpush1.msra.mxu0 0.0
    %252 = vmatprep.subr.mxu0 0.0
    %253 = vmatpush1.msra.mxu0 0.0
    %254 = vmatprep.subr.mxu0 0.0
    %255 = vmatpush1.msra.mxu0 0.0
    %256 = vmatprep.subr.mxu0 0.0
    %257 = vmatpush1.msra.mxu0 0.0
    %258 = vmatprep.subr.mxu0 0.0
    %259 = vmatpush1.msra.mxu0 0.0
    %260 = vmatprep.subr.mxu0 0.0
    %261 = vmatpush1.msra.mxu0 0.0
    %262 = vmatprep.subr.mxu0 0.0
    %263 = vmatpush1.msra.mxu0 0.0
    %264 = vmatprep.subr.mxu0 0.0
    %265 = vmatpush1.msra.mxu0 0.0
    %266 = vmatprep.subr.mxu0 0.0
    %267 = vmatpush1.msra.mxu0 0.0
    %268 = vmatprep.subr.mxu0 0.0
    %269 = vmatpush1.msra.mxu0 0.0
    %270 = vmatprep.subr.mxu0 0.0
    %271 = vmatpush1.msra.mxu0 0.0
    %272 = vmatprep.subr.mxu0 0.0
    %273 = vmatpush1.msra.mxu0 0.0
    %274 = vmatprep.subr.mxu0 0.0
    %275 = vmatpush1.msra.mxu0 0.0
    %276 = vmatprep.subr.mxu0 0.0
    %277 = vmatpush1.msra.mxu0 0.0
    %278 = vmatprep.subr.mxu0 0.0
    %279 = vmatpush1.msra.mxu0 0.0
    %280 = vmatprep.subr.mxu0 0.0
    %281 = vmatpush1.msra.mxu0 0.0
    %282 = vmatprep.subr.mxu0 0.0
    %283 = vmatpush1.msra.mxu0 0.0
    %284 = vmatprep.subr.mxu0 0.0
    %285 = vmatpush1.msra.mxu0 0.0
    %286 = vmatprep.subr.mxu0 0.0
    %287 = vmatpush1.msra.mxu0 0.0
    %288 = vmatprep.subr.mxu0 0.0
    %289 = vmatpush1.msra.mxu0 0.0
    %290 = vmatprep.subr.mxu0 0.0
    %291 = vmatpush1.msra.mxu0 0.0
    %292 = vmatprep.subr.mxu0 0.0
    %293 = vmatpush1.msra.mxu0 0.0
    %294 = vmatprep.subr.mxu0 0.0
    %295 = vmatpush1.msra.mxu0 0.0
    %296 = vmatprep.subr.mxu0 0.0
    %297 = vmatpush1.msra.mxu0 0.0
    %298 = vmatprep.subr.mxu0 0.0
    %299 = vmatpush1.msra.mxu0 0.0
    %300 = vmatprep.subr.mxu0 0.0
    %301 = vmatpush1.msra.mxu0 0.0
    %302 = vmatprep.subr.mxu0 0.0
    %303 = vmatpush1.msra.mxu0 0.0
    %304 = vmatprep.subr.mxu0 0.0
    %305 = vmatpush1.msra.mxu0 0.0
    %306 = vmatprep.mubr.f32.mxu0 0.0
    %307 = vmatmul.mubr.f32.gmra.mrb[0].mxu0 %v237
    %v308 = vpop.f32.mrb[0].mxu0
    %v309 = vadd.f32 %v234, %v308
    %v310 = vpop.f32.mrb[0].mxu0
    %311 = vmatprep.mubr.f32.mxu0 0.0
    %312 = vmatmul.mubr.f32.gmra.mrb[0].mxu0 %v240
    %v313 = vpop.f32.mrb[0].mxu0
    %v314 = vadd.f32 %v234, %v313
    %v315 = vpop.f32.mrb[0].mxu0
    %316 = vdwg.mxu0
    %v317 = vlaneseq
    %v318 = vshrl.u32 %v317, 7
    %v319 = vsub.s32 0, %v318
    %v320 = vrot.slane %v119, %v319
    %vm321 = vcmask 261120
    %v323 = vsel %vm321, %v213, 0
    %v326 = vsel %vm321, %v218, 0
    %v329 = vsel %vm321, %v223, 0
    %v332 = vsel %vm321, %v228, 0
    %334 = vmatprep.subr.mxu0 0.0
    %335 = vmatpush1.msra.mxu0 %v84
    %336 = vmatprep.subr.mxu0 0.0
    %337 = vmatpush1.msra.mxu0 %v85
    %338 = vmatprep.subr.mxu0 0.0
    %339 = vmatpush1.msra.mxu0 %v86
    %340 = vmatprep.subr.mxu0 0.0
    %341 = vmatpush1.msra.mxu0 %v87
    %342 = vmatprep.subr.mxu0 0.0
    %343 = vmatpush1.msra.mxu0 0.0
    %344 = vmatprep.subr.mxu0 0.0
    %345 = vmatpush1.msra.mxu0 0.0
    %346 = vmatprep.subr.mxu0 0.0
    %347 = vmatpush1.msra.mxu0 0.0
    %348 = vmatprep.subr.mxu0 0.0
    %349 = vmatpush1.msra.mxu0 0.0
    %350 = vmatprep.subr.mxu0 0.0
    %351 = vmatpush1.msra.mxu0 0.0
    %352 = vmatprep.subr.mxu0 0.0
    %353 = vmatpush1.msra.mxu0 0.0
    %354 = vmatprep.subr.mxu0 0.0
    %355 = vmatpush1.msra.mxu0 0.0
    %356 = vmatprep.subr.mxu0 0.0
    %357 = vmatpush1.msra.mxu0 0.0
    %358 = vmatprep.subr.mxu0 0.0
    %359 = vmatpush1.msra.mxu0 0.0
    %360 = vmatprep.subr.mxu0 0.0
    %361 = vmatpush1.msra.mxu0 0.0
    %362 = vmatprep.subr.mxu0 0.0
    %363 = vmatpush1.msra.mxu0 0.0
    %364 = vmatprep.subr.mxu0 0.0
    %365 = vmatpush1.msra.mxu0 0.0
    %366 = vmatprep.subr.mxu0 0.0
    %367 = vmatpush1.msra.mxu0 0.0
    %368 = vmatprep.subr.mxu0 0.0
    %369 = vmatpush1.msra.mxu0 0.0
    %370 = vmatprep.subr.mxu0 0.0
    %371 = vmatpush1.msra.mxu0 0.0
    %372 = vmatprep.subr.mxu0 0.0
    %373 = vmatpush1.msra.mxu0 0.0
    %374 = vmatprep.subr.mxu0 0.0
    %375 = vmatpush1.msra.mxu0 0.0
    %376 = vmatprep.subr.mxu0 0.0
    %377 = vmatpush1.msra.mxu0 0.0
    %378 = vmatprep.subr.mxu0 0.0
    %379 = vmatpush1.msra.mxu0 0.0
    %380 = vmatprep.subr.mxu0 0.0
    %381 = vmatpush1.msra.mxu0 0.0
    %382 = vmatprep.subr.mxu0 0.0
    %383 = vmatpush1.msra.mxu0 0.0
    %384 = vmatprep.subr.mxu0 0.0
    %385 = vmatpush1.msra.mxu0 0.0
    %386 = vmatprep.subr.mxu0 0.0
    %387 = vmatpush1.msra.mxu0 0.0
    %388 = vmatprep.subr.mxu0 0.0
    %389 = vmatpush1.msra.mxu0 0.0
    %390 = vmatprep.subr.mxu0 0.0
    %391 = vmatpush1.msra.mxu0 0.0
    %392 = vmatprep.subr.mxu0 0.0
    %393 = vmatpush1.msra.mxu0 0.0
    %394 = vmatprep.subr.mxu0 0.0
    %395 = vmatpush1.msra.mxu0 0.0
    %396 = vmatprep.subr.mxu0 0.0
    %397 = vmatpush1.msra.mxu0 0.0
    %398 = vmatprep.mubr.f32.mxu0 0.0
    %399 = vmatmul.mubr.f32.gmra.mrb[0].mxu0 %v323
    %v400 = vpop.f32.mrb[0].mxu0
    %v401 = vadd.f32 %v320, %v400
    %v402 = vpop.f32.mrb[0].mxu0
    %403 = vmatprep.mubr.f32.mxu0 0.0
    %404 = vmatmul.mubr.f32.gmra.mrb[0].mxu0 %v326
    %v405 = vpop.f32.mrb[0].mxu0
    %v406 = vadd.f32 %v320, %v405
    %v407 = vpop.f32.mrb[0].mxu0
    %408 = vmatprep.mubr.f32.mxu0 0.0
    %409 = vmatmul.mubr.f32.gmra.mrb[0].mxu0 %v329
    %v410 = vpop.f32.mrb[0].mxu0
    %v411 = vadd.f32 %v320, %v410
    %v412 = vpop.f32.mrb[0].mxu0
    %413 = vmatprep.mubr.f32.mxu0 0.0
    %414 = vmatmul.mubr.f32.gmra.mrb[0].mxu0 %v332
    %v415 = vpop.f32.mrb[0].mxu0
    %v416 = vadd.f32 %v320, %v415
    %v417 = vpop.f32.mrb[0].mxu0
    %418 = vdwg.mxu0
    %v419 = vmul.f32 %v401, 0.35355338
    %v420 = vmul.f32 %v406, 0.35355338
    %v421 = vmul.f32 %v411, 0.35355338
    %v422 = vmul.f32 %v416, 0.35355338
    %v423 = vlaneseq
    %v424 = vshrl.u32 %v423, 7
    %v425 = vsub.s32 0, %v424
    %v426 = vrot.slane %v120, %v425
    %v428 = vsel %vm321, %v309, 0
    %v431 = vsel %vm321, %v314, 0
    %433 = vmatprep.subr.mxu0 0.0
    %434 = vmatpush1.msra.mxu0 %v89
    %435 = vmatprep.subr.mxu0 0.0
    %436 = vmatpush1.msra.mxu0 %v90
    %437 = vmatprep.subr.mxu0 0.0
    %438 = vmatpush1.msra.mxu0 %v91
    %439 = vmatprep.subr.mxu0 0.0
    %440 = vmatpush1.msra.mxu0 %v92
    %441 = vmatprep.subr.mxu0 0.0
    %442 = vmatpush1.msra.mxu0 0.0
    %443 = vmatprep.subr.mxu0 0.0
    %444 = vmatpush1.msra.mxu0 0.0
    %445 = vmatprep.subr.mxu0 0.0
    %446 = vmatpush1.msra.mxu0 0.0
    %447 = vmatprep.subr.mxu0 0.0
    %448 = vmatpush1.msra.mxu0 0.0
    %449 = vmatprep.subr.mxu0 0.0
    %450 = vmatpush1.msra.mxu0 0.0
    %451 = vmatprep.subr.mxu0 0.0
    %452 = vmatpush1.msra.mxu0 0.0
    %453 = vmatprep.subr.mxu0 0.0
    %454 = vmatpush1.msra.mxu0 0.0
    %455 = vmatprep.subr.mxu0 0.0
    %456 = vmatpush1.msra.mxu0 0.0
    %457 = vmatprep.subr.mxu0 0.0
    %458 = vmatpush1.msra.mxu0 0.0
    %459 = vmatprep.subr.mxu0 0.0
    %460 = vmatpush1.msra.mxu0 0.0
    %461 = vmatprep.subr.mxu0 0.0
    %462 = vmatpush1.msra.mxu0 0.0
    %463 = vmatprep.subr.mxu0 0.0
    %464 = vmatpush1.msra.mxu0 0.0
    %465 = vmatprep.subr.mxu0 0.0
    %466 = vmatpush1.msra.mxu0 0.0
    %467 = vmatprep.subr.mxu0 0.0
    %468 = vmatpush1.msra.mxu0 0.0
    %469 = vmatprep.subr.mxu0 0.0
    %470 = vmatpush1.msra.mxu0 0.0
    %471 = vmatprep.subr.mxu0 0.0
    %472 = vmatpush1.msra.mxu0 0.0
    %473 = vmatprep.subr.mxu0 0.0
    %474 = vmatpush1.msra.mxu0 0.0
    %475 = vmatprep.subr.mxu0 0.0
    %476 = vmatpush1.msra.mxu0 0.0
    %477 = vmatprep.subr.mxu0 0.0
    %478 = vmatpush1.msra.mxu0 0.0
    %479 = vmatprep.subr.mxu0 0.0
    %480 = vmatpush1.msra.mxu0 0.0
    %481 = vmatprep.subr.mxu0 0.0
    %482 = vmatpush1.msra.mxu0 0.0
    %483 = vmatprep.subr.mxu0 0.0
    %484 = vmatpush1.msra.mxu0 0.0
    %485 = vmatprep.subr.mxu0 0.0
    %486 = vmatpush1.msra.mxu0 0.0
    %487 = vmatprep.subr.mxu0 0.0
    %488 = vmatpush1.msra.mxu0 0.0
    %489 = vmatprep.subr.mxu0 0.0
    %490 = vmatpush1.msra.mxu0 0.0
    %491 = vmatprep.subr.mxu0 0.0
    %492 = vmatpush1.msra.mxu0 0.0
    %493 = vmatprep.subr.mxu0 0.0
    %494 = vmatpush1.msra.mxu0 0.0
    %495 = vmatprep.subr.mxu0 0.0
    %496 = vmatpush1.msra.mxu0 0.0
    %497 = vmatprep.mubr.f32.mxu0 0.0
    %498 = vmatmul.mubr.f32.gmra.mrb[0].mxu0 %v428
    %v499 = vpop.f32.mrb[0].mxu0
    %v500 = vadd.f32 %v426, %v499
    %v501 = vpop.f32.mrb[0].mxu0
    %502 = vmatprep.mubr.f32.mxu0 0.0
    %503 = vmatmul.mubr.f32.gmra.mrb[0].mxu0 %v431
    %v504 = vpop.f32.mrb[0].mxu0
    %v505 = vadd.f32 %v426, %v504
    %v506 = vpop.f32.mrb[0].mxu0
    %507 = vdwg.mxu0
    %v508 = vlaneseq
    %v509 = vshrl.u32 %v508, 7
    %v510 = vsub.s32 0, %v509
    %v511 = vrot.slane %v121, %v510
    %512 = vmatprep.subr.mxu0 0.0
    %513 = vmatpush1.msra.mxu0 %v94
    %514 = vmatprep.subr.mxu0 0.0
    %515 = vmatpush1.msra.mxu0 %v95
    %516 = vmatprep.subr.mxu0 0.0
    %517 = vmatpush1.msra.mxu0 %v96
    %518 = vmatprep.subr.mxu0 0.0
    %519 = vmatpush1.msra.mxu0 %v97
    %520 = vmatprep.subr.mxu0 0.0
    %521 = vmatpush1.msra.mxu0 0.0
    %522 = vmatprep.subr.mxu0 0.0
    %523 = vmatpush1.msra.mxu0 0.0
    %524 = vmatprep.subr.mxu0 0.0
    %525 = vmatpush1.msra.mxu0 0.0
    %526 = vmatprep.subr.mxu0 0.0
    %527 = vmatpush1.msra.mxu0 0.0
    %528 = vmatprep.subr.mxu0 0.0
    %529 = vmatpush1.msra.mxu0 0.0
    %530 = vmatprep.subr.mxu0 0.0
    %531 = vmatpush1.msra.mxu0 0.0
    %532 = vmatprep.subr.mxu0 0.0
    %533 = vmatpush1.msra.mxu0 0.0
    %534 = vmatprep.subr.mxu0 0.0
    %535 = vmatpush1.msra.mxu0 0.0
    %536 = vmatprep.subr.mxu0 0.0
    %537 = vmatpush1.msra.mxu0 0.0
    %538 = vmatprep.subr.mxu0 0.0
    %539 = vmatpush1.msra.mxu0 0.0
    %540 = vmatprep.subr.mxu0 0.0
    %541 = vmatpush1.msra.mxu0 0.0
    %542 = vmatprep.subr.mxu0 0.0
    %543 = vmatpush1.msra.mxu0 0.0
    %544 = vmatprep.subr.mxu0 0.0
    %545 = vmatpush1.msra.mxu0 0.0
    %546 = vmatprep.subr.mxu0 0.0
    %547 = vmatpush1.msra.mxu0 0.0
    %548 = vmatprep.subr.mxu0 0.0
    %549 = vmatpush1.msra.mxu0 0.0
    %550 = vmatprep.subr.mxu0 0.0
    %551 = vmatpush1.msra.mxu0 0.0
    %552 = vmatprep.subr.mxu0 0.0
    %553 = vmatpush1.msra.mxu0 0.0
    %554 = vmatprep.subr.mxu0 0.0
    %555 = vmatpush1.msra.mxu0 0.0
    %556 = vmatprep.subr.mxu0 0.0
    %557 = vmatpush1.msra.mxu0 0.0
    %558 = vmatprep.subr.mxu0 0.0
    %559 = vmatpush1.msra.mxu0 0.0
    %560 = vmatprep.subr.mxu0 0.0
    %561 = vmatpush1.msra.mxu0 0.0
    %562 = vmatprep.subr.mxu0 0.0
    %563 = vmatpush1.msra.mxu0 0.0
    %564 = vmatprep.subr.mxu0 0.0
    %565 = vmatpush1.msra.mxu0 0.0
    %566 = vmatprep.subr.mxu0 0.0
    %567 = vmatpush1.msra.mxu0 0.0
    %568 = vmatprep.subr.mxu0 0.0
    %569 = vmatpush1.msra.mxu0 0.0
    %570 = vmatprep.subr.mxu0 0.0
    %571 = vmatpush1.msra.mxu0 0.0
    %572 = vmatprep.subr.mxu0 0.0
    %573 = vmatpush1.msra.mxu0 0.0
    %574 = vmatprep.subr.mxu0 0.0
    %575 = vmatpush1.msra.mxu0 0.0
    %576 = vmatprep.mubr.f32.mxu0 0.0
    %577 = vmatmul.mubr.f32.gmra.mrb[0].mxu0 %v428
    %v578 = vpop.f32.mrb[0].mxu0
    %v579 = vadd.f32 %v511, %v578
    %v580 = vpop.f32.mrb[0].mxu0
    %581 = vmatprep.mubr.f32.mxu0 0.0
    %582 = vmatmul.mubr.f32.gmra.mrb[0].mxu0 %v431
    %v583 = vpop.f32.mrb[0].mxu0
    %v584 = vadd.f32 %v511, %v583
    %v585 = vpop.f32.mrb[0].mxu0
    %586 = vdwg.mxu0
    %591 = vrot.lane.b32.xlu0 %v419, 126
    %v592 = vpop.permute.xlu0 %591
    %593 = vrot.lane.b32.xlu0 %v420, 126
    %v594 = vpop.permute.xlu0 %593
    %595 = vrot.lane.b32.xlu0 %v421, 126
    %v596 = vpop.permute.xlu0 %595
    %597 = vrot.lane.b32.xlu0 %v422, 126
    %v598 = vpop.permute.xlu0 %597
    %599 = vrot.lane.b32.xlu0 %v419, 124
    %v600 = vpop.permute.xlu0 %599
    %601 = vrot.lane.b32.xlu0 %v420, 124
    %v602 = vpop.permute.xlu0 %601
    %603 = vrot.lane.b32.xlu0 %v421, 124
    %v604 = vpop.permute.xlu0 %603
    %605 = vrot.lane.b32.xlu0 %v422, 124
    %v606 = vpop.permute.xlu0 %605
    %607 = vrot.lane.b32.xlu0 %v419, 122
    %v608 = vpop.permute.xlu0 %607
    %609 = vrot.lane.b32.xlu0 %v420, 122
    %v610 = vpop.permute.xlu0 %609
    %611 = vrot.lane.b32.xlu0 %v421, 122
    %v612 = vpop.permute.xlu0 %611
    %613 = vrot.lane.b32.xlu0 %v422, 122
    %v614 = vpop.permute.xlu0 %613
    %617 = vrot.lane.b32.xlu0 %v500, 126
    %v618 = vpop.permute.xlu0 %617
    %619 = vrot.lane.b32.xlu0 %v505, 126
    %v620 = vpop.permute.xlu0 %619
    %621 = vrot.lane.b32.xlu0 %v500, 124
    %v622 = vpop.permute.xlu0 %621
    %623 = vrot.lane.b32.xlu0 %v505, 124
    %v624 = vpop.permute.xlu0 %623
    %625 = vrot.lane.b32.xlu0 %v500, 122
    %v626 = vpop.permute.xlu0 %625
    %627 = vrot.lane.b32.xlu0 %v505, 122
    %v628 = vpop.permute.xlu0 %627
    %631 = vrot.lane.b32.xlu0 %v579, 120
    %v632 = vpop.permute.xlu0 %631
    %633 = vrot.lane.b32.xlu0 %v584, 120
    %v634 = vpop.permute.xlu0 %633
    %637 = vrot.lane.b32.xlu0 %v579, 112
    %v638 = vpop.permute.xlu0 %637
    %639 = vrot.lane.b32.xlu0 %v584, 112
    %v640 = vpop.permute.xlu0 %639
    %643 = vrot.lane.b32.xlu0 %v579, 104
    %v644 = vpop.permute.xlu0 %643
    %645 = vrot.lane.b32.xlu0 %v584, 104
    %v646 = vpop.permute.xlu0 %645
    %vm649 = vcmask 15360
    %v650 = vsel %vm649, %v419, 0
    %v652 = vsel %vm649, %v420, 0
    %v654 = vsel %vm649, %v500, 0
    %656 = vmatprep.subr.mxu0 0.0
    %657 = vmatpush1.xpose.msra.mxu0 %v654
    %658 = vmatprep.subr.mxu0 0.0
    %659 = vmatpush1.xpose.msra.mxu0 0.0
    %660 = vmatprep.subr.mxu0 0.0
    %661 = vmatpush1.xpose.msra.mxu0 0.0
    %662 = vmatprep.subr.mxu0 0.0
    %663 = vmatpush1.xpose.msra.mxu0 0.0
    %664 = vmatprep.subr.mxu0 0.0
    %665 = vmatpush1.xpose.msra.mxu0 0.0
    %666 = vmatprep.subr.mxu0 0.0
    %667 = vmatpush1.xpose.msra.mxu0 0.0
    %668 = vmatprep.subr.mxu0 0.0
    %669 = vmatpush1.xpose.msra.mxu0 0.0
    %670 = vmatprep.subr.mxu0 0.0
    %671 = vmatpush1.xpose.msra.mxu0 0.0
    %672 = vmatprep.subr.mxu0 0.0
    %673 = vmatpush1.xpose.msra.mxu0 0.0
    %674 = vmatprep.subr.mxu0 0.0
    %675 = vmatpush1.xpose.msra.mxu0 0.0
    %676 = vmatprep.subr.mxu0 0.0
    %677 = vmatpush1.xpose.msra.mxu0 0.0
    %678 = vmatprep.subr.mxu0 0.0
    %679 = vmatpush1.xpose.msra.mxu0 0.0
    %680 = vmatprep.subr.mxu0 0.0
    %681 = vmatpush1.xpose.msra.mxu0 0.0
    %682 = vmatprep.subr.mxu0 0.0
    %683 = vmatpush1.xpose.msra.mxu0 0.0
    %684 = vmatprep.subr.mxu0 0.0
    %685 = vmatpush1.xpose.msra.mxu0 0.0
    %686 = vmatprep.subr.mxu0 0.0
    %687 = vmatpush1.xpose.msra.mxu0 0.0
    %688 = vmatprep.subr.mxu0 0.0
    %689 = vmatpush1.xpose.msra.mxu0 0.0
    %690 = vmatprep.subr.mxu0 0.0
    %691 = vmatpush1.xpose.msra.mxu0 0.0
    %692 = vmatprep.subr.mxu0 0.0
    %693 = vmatpush1.xpose.msra.mxu0 0.0
    %694 = vmatprep.subr.mxu0 0.0
    %695 = vmatpush1.xpose.msra.mxu0 0.0
    %696 = vmatprep.subr.mxu0 0.0
    %697 = vmatpush1.xpose.msra.mxu0 0.0
    %698 = vmatprep.subr.mxu0 0.0
    %699 = vmatpush1.xpose.msra.mxu0 0.0
    %700 = vmatprep.subr.mxu0 0.0
    %701 = vmatpush1.xpose.msra.mxu0 0.0
    %702 = vmatprep.subr.mxu0 0.0
    %703 = vmatpush1.xpose.msra.mxu0 0.0
    %704 = vmatprep.subr.mxu0 0.0
    %705 = vmatpush1.xpose.msra.mxu0 0.0
    %706 = vmatprep.subr.mxu0 0.0
    %707 = vmatpush1.xpose.msra.mxu0 0.0
    %708 = vmatprep.subr.mxu0 0.0
    %709 = vmatpush1.xpose.msra.mxu0 0.0
    %710 = vmatprep.subr.mxu0 0.0
    %711 = vmatpush1.xpose.msra.mxu0 0.0
    %712 = vmatprep.subr.mxu0 0.0
    %713 = vmatpush1.xpose.msra.mxu0 0.0
    %714 = vmatprep.subr.mxu0 0.0
    %715 = vmatpush1.xpose.msra.mxu0 0.0
    %716 = vmatprep.subr.mxu0 0.0
    %717 = vmatpush1.xpose.msra.mxu0 0.0
    %718 = vmatprep.subr.mxu0 0.0
    %719 = vmatpush1.xpose.msra.mxu0 0.0
    %720 = vmatprep.mubr.f32.mxu0 0.0
    %721 = vmatmul.mubr.f32.gmra.mrb[0].mxu0 %v650
    %v722 = vpop.f32.mrb[0].mxu0
    %v723 = vadd.f32 0.0, %v722
    %v724 = vpop.f32.mrb[0].mxu0
    %725 = vmatprep.mubr.f32.mxu0 0.0
    %726 = vmatmul.mubr.f32.gmra.mrb[0].mxu0 %v652
    %v727 = vpop.f32.mrb[0].mxu0
    %v728 = vadd.f32 0.0, %v727
    %v729 = vpop.f32.mrb[0].mxu0
    %730 = vdwg.mxu0
    %v731 = vsel %vm649, %v421, 0
    %v733 = vsel %vm649, %v422, 0
    %v735 = vsel %vm649, %v505, 0
    %737 = vmatprep.subr.mxu0 0.0
    %738 = vmatpush1.xpose.msra.mxu0 %v735
    %739 = vmatprep.subr.mxu0 0.0
    %740 = vmatpush1.xpose.msra.mxu0 0.0
    %741 = vmatprep.subr.mxu0 0.0
    %742 = vmatpush1.xpose.msra.mxu0 0.0
    %743 = vmatprep.subr.mxu0 0.0
    %744 = vmatpush1.xpose.msra.mxu0 0.0
    %745 = vmatprep.subr.mxu0 0.0
    %746 = vmatpush1.xpose.msra.mxu0 0.0
    %747 = vmatprep.subr.mxu0 0.0
    %748 = vmatpush1.xpose.msra.mxu0 0.0
    %749 = vmatprep.subr.mxu0 0.0
    %750 = vmatpush1.xpose.msra.mxu0 0.0
    %751 = vmatprep.subr.mxu0 0.0
    %752 = vmatpush1.xpose.msra.mxu0 0.0
    %753 = vmatprep.subr.mxu0 0.0
    %754 = vmatpush1.xpose.msra.mxu0 0.0
    %755 = vmatprep.subr.mxu0 0.0
    %756 = vmatpush1.xpose.msra.mxu0 0.0
    %757 = vmatprep.subr.mxu0 0.0
    %758 = vmatpush1.xpose.msra.mxu0 0.0
    %759 = vmatprep.subr.mxu0 0.0
    %760 = vmatpush1.xpose.msra.mxu0 0.0
    %761 = vmatprep.subr.mxu0 0.0
    %762 = vmatpush1.xpose.msra.mxu0 0.0
    %763 = vmatprep.subr.mxu0 0.0
    %764 = vmatpush1.xpose.msra.mxu0 0.0
    %765 = vmatprep.subr.mxu0 0.0
    %766 = vmatpush1.xpose.msra.mxu0 0.0
    %767 = vmatprep.subr.mxu0 0.0
    %768 = vmatpush1.xpose.msra.mxu0 0.0
    %769 = vmatprep.subr.mxu0 0.0
    %770 = vmatpush1.xpose.msra.mxu0 0.0
    %771 = vmatprep.subr.mxu0 0.0
    %772 = vmatpush1.xpose.msra.mxu0 0.0
    %773 = vmatprep.subr.mxu0 0.0
    %774 = vmatpush1.xpose.msra.mxu0 0.0
    %775 = vmatprep.subr.mxu0 0.0
    %776 = vmatpush1.xpose.msra.mxu0 0.0
    %777 = vmatprep.subr.mxu0 0.0
    %778 = vmatpush1.xpose.msra.mxu0 0.0
    %779 = vmatprep.subr.mxu0 0.0
    %780 = vmatpush1.xpose.msra.mxu0 0.0
    %781 = vmatprep.subr.mxu0 0.0
    %782 = vmatpush1.xpose.msra.mxu0 0.0
    %783 = vmatprep.subr.mxu0 0.0
    %784 = vmatpush1.xpose.msra.mxu0 0.0
    %785 = vmatprep.subr.mxu0 0.0
    %786 = vmatpush1.xpose.msra.mxu0 0.0
    %787 = vmatprep.subr.mxu0 0.0
    %788 = vmatpush1.xpose.msra.mxu0 0.0
    %789 = vmatprep.subr.mxu0 0.0
    %790 = vmatpush1.xpose.msra.mxu0 0.0
    %791 = vmatprep.subr.mxu0 0.0
    %792 = vmatpush1.xpose.msra.mxu0 0.0
    %793 = vmatprep.subr.mxu0 0.0
    %794 = vmatpush1.xpose.msra.mxu0 0.0
    %795 = vmatprep.subr.mxu0 0.0
    %796 = vmatpush1.xpose.msra.mxu0 0.0
    %797 = vmatprep.subr.mxu0 0.0
    %798 = vmatpush1.xpose.msra.mxu0 0.0
    %799 = vmatprep.subr.mxu0 0.0
    %800 = vmatpush1.xpose.msra.mxu0 0.0
    %801 = vmatprep.mubr.f32.mxu0 0.0
    %802 = vmatmul.mubr.f32.gmra.mrb[0].mxu0 %v731
    %v803 = vpop.f32.mrb[0].mxu0
    %v804 = vadd.f32 0.0, %v803
    %v805 = vpop.f32.mrb[0].mxu0
    %806 = vmatprep.mubr.f32.mxu0 0.0
    %807 = vmatmul.mubr.f32.gmra.mrb[0].mxu0 %v733
    %v808 = vpop.f32.mrb[0].mxu0
    %v809 = vadd.f32 0.0, %v808
    %v810 = vpop.f32.mrb[0].mxu0
    %811 = vdwg.mxu0
    %v812 = vsel %vm649, %v592, 0
    %v814 = vsel %vm649, %v594, 0
    %v816 = vsel %vm649, %v618, 0
    %818 = vmatprep.subr.mxu0 0.0
    %819 = vmatpush1.xpose.msra.mxu0 %v816
    %820 = vmatprep.subr.mxu0 0.0
    %821 = vmatpush1.xpose.msra.mxu0 0.0
    %822 = vmatprep.subr.mxu0 0.0
    %823 = vmatpush1.xpose.msra.mxu0 0.0
    %824 = vmatprep.subr.mxu0 0.0
    %825 = vmatpush1.xpose.msra.mxu0 0.0
    %826 = vmatprep.subr.mxu0 0.0
    %827 = vmatpush1.xpose.msra.mxu0 0.0
    %828 = vmatprep.subr.mxu0 0.0
    %829 = vmatpush1.xpose.msra.mxu0 0.0
    %830 = vmatprep.subr.mxu0 0.0
    %831 = vmatpush1.xpose.msra.mxu0 0.0
    %832 = vmatprep.subr.mxu0 0.0
    %833 = vmatpush1.xpose.msra.mxu0 0.0
    %834 = vmatprep.subr.mxu0 0.0
    %835 = vmatpush1.xpose.msra.mxu0 0.0
    %836 = vmatprep.subr.mxu0 0.0
    %837 = vmatpush1.xpose.msra.mxu0 0.0
    %838 = vmatprep.subr.mxu0 0.0
    %839 = vmatpush1.xpose.msra.mxu0 0.0
    %840 = vmatprep.subr.mxu0 0.0
    %841 = vmatpush1.xpose.msra.mxu0 0.0
    %842 = vmatprep.subr.mxu0 0.0
    %843 = vmatpush1.xpose.msra.mxu0 0.0
    %844 = vmatprep.subr.mxu0 0.0
    %845 = vmatpush1.xpose.msra.mxu0 0.0
    %846 = vmatprep.subr.mxu0 0.0
    %847 = vmatpush1.xpose.msra.mxu0 0.0
    %848 = vmatprep.subr.mxu0 0.0
    %849 = vmatpush1.xpose.msra.mxu0 0.0
    %850 = vmatprep.subr.mxu0 0.0
    %851 = vmatpush1.xpose.msra.mxu0 0.0
    %852 = vmatprep.subr.mxu0 0.0
    %853 = vmatpush1.xpose.msra.mxu0 0.0
    %854 = vmatprep.subr.mxu0 0.0
    %855 = vmatpush1.xpose.msra.mxu0 0.0
    %856 = vmatprep.subr.mxu0 0.0
    %857 = vmatpush1.xpose.msra.mxu0 0.0
    %858 = vmatprep.subr.mxu0 0.0
    %859 = vmatpush1.xpose.msra.mxu0 0.0
    %860 = vmatprep.subr.mxu0 0.0
    %861 = vmatpush1.xpose.msra.mxu0 0.0
    %862 = vmatprep.subr.mxu0 0.0
    %863 = vmatpush1.xpose.msra.mxu0 0.0
    %864 = vmatprep.subr.mxu0 0.0
    %865 = vmatpush1.xpose.msra.mxu0 0.0
    %866 = vmatprep.subr.mxu0 0.0
    %867 = vmatpush1.xpose.msra.mxu0 0.0
    %868 = vmatprep.subr.mxu0 0.0
    %869 = vmatpush1.xpose.msra.mxu0 0.0
    %870 = vmatprep.subr.mxu0 0.0
    %871 = vmatpush1.xpose.msra.mxu0 0.0
    %872 = vmatprep.subr.mxu0 0.0
    %873 = vmatpush1.xpose.msra.mxu0 0.0
    %874 = vmatprep.subr.mxu0 0.0
    %875 = vmatpush1.xpose.msra.mxu0 0.0
    %876 = vmatprep.subr.mxu0 0.0
    %877 = vmatpush1.xpose.msra.mxu0 0.0
    %878 = vmatprep.subr.mxu0 0.0
    %879 = vmatpush1.xpose.msra.mxu0 0.0
    %880 = vmatprep.subr.mxu0 0.0
    %881 = vmatpush1.xpose.msra.mxu0 0.0
    %882 = vmatprep.mubr.f32.mxu0 0.0
    %883 = vmatmul.mubr.f32.gmra.mrb[0].mxu0 %v812
    %v884 = vpop.f32.mrb[0].mxu0
    %v885 = vadd.f32 0.0, %v884
    %v886 = vpop.f32.mrb[0].mxu0
    %887 = vmatprep.mubr.f32.mxu0 0.0
    %888 = vmatmul.mubr.f32.gmra.mrb[0].mxu0 %v814
    %v889 = vpop.f32.mrb[0].mxu0
    %v890 = vadd.f32 0.0, %v889
    %v891 = vpop.f32.mrb[0].mxu0
    %892 = vdwg.mxu0
    %v893 = vsel %vm649, %v596, 0
    %v895 = vsel %vm649, %v598, 0
    %v897 = vsel %vm649, %v620, 0
    %899 = vmatprep.subr.mxu0 0.0
    %900 = vmatpush1.xpose.msra.mxu0 %v897
    %901 = vmatprep.subr.mxu0 0.0
    %902 = vmatpush1.xpose.msra.mxu0 0.0
    %903 = vmatprep.subr.mxu0 0.0
    %904 = vmatpush1.xpose.msra.mxu0 0.0
    %905 = vmatprep.subr.mxu0 0.0
    %906 = vmatpush1.xpose.msra.mxu0 0.0
    %907 = vmatprep.subr.mxu0 0.0
    %908 = vmatpush1.xpose.msra.mxu0 0.0
    %909 = vmatprep.subr.mxu0 0.0
    %910 = vmatpush1.xpose.msra.mxu0 0.0
    %911 = vmatprep.subr.mxu0 0.0
    %912 = vmatpush1.xpose.msra.mxu0 0.0
    %913 = vmatprep.subr.mxu0 0.0
    %914 = vmatpush1.xpose.msra.mxu0 0.0
    %915 = vmatprep.subr.mxu0 0.0
    %916 = vmatpush1.xpose.msra.mxu0 0.0
    %917 = vmatprep.subr.mxu0 0.0
    %918 = vmatpush1.xpose.msra.mxu0 0.0
    %919 = vmatprep.subr.mxu0 0.0
    %920 = vmatpush1.xpose.msra.mxu0 0.0
    %921 = vmatprep.subr.mxu0 0.0
    %922 = vmatpush1.xpose.msra.mxu0 0.0
    %923 = vmatprep.subr.mxu0 0.0
    %924 = vmatpush1.xpose.msra.mxu0 0.0
    %925 = vmatprep.subr.mxu0 0.0
    %926 = vmatpush1.xpose.msra.mxu0 0.0
    %927 = vmatprep.subr.mxu0 0.0
    %928 = vmatpush1.xpose.msra.mxu0 0.0
    %929 = vmatprep.subr.mxu0 0.0
    %930 = vmatpush1.xpose.msra.mxu0 0.0
    %931 = vmatprep.subr.mxu0 0.0
    %932 = vmatpush1.xpose.msra.mxu0 0.0
    %933 = vmatprep.subr.mxu0 0.0
    %934 = vmatpush1.xpose.msra.mxu0 0.0
    %935 = vmatprep.subr.mxu0 0.0
    %936 = vmatpush1.xpose.msra.mxu0 0.0
    %937 = vmatprep.subr.mxu0 0.0
    %938 = vmatpush1.xpose.msra.mxu0 0.0
    %939 = vmatprep.subr.mxu0 0.0
    %940 = vmatpush1.xpose.msra.mxu0 0.0
    %941 = vmatprep.subr.mxu0 0.0
    %942 = vmatpush1.xpose.msra.mxu0 0.0
    %943 = vmatprep.subr.mxu0 0.0
    %944 = vmatpush1.xpose.msra.mxu0 0.0
    %945 = vmatprep.subr.mxu0 0.0
    %946 = vmatpush1.xpose.msra.mxu0 0.0
    %947 = vmatprep.subr.mxu0 0.0
    %948 = vmatpush1.xpose.msra.mxu0 0.0
    %949 = vmatprep.subr.mxu0 0.0
    %950 = vmatpush1.xpose.msra.mxu0 0.0
    %951 = vmatprep.subr.mxu0 0.0
    %952 = vmatpush1.xpose.msra.mxu0 0.0
    %953 = vmatprep.subr.mxu0 0.0
    %954 = vmatpush1.xpose.msra.mxu0 0.0
    %955 = vmatprep.subr.mxu0 0.0
    %956 = vmatpush1.xpose.msra.mxu0 0.0
    %957 = vmatprep.subr.mxu0 0.0
    %958 = vmatpush1.xpose.msra.mxu0 0.0
    %959 = vmatprep.subr.mxu0 0.0
    %960 = vmatpush1.xpose.msra.mxu0 0.0
    %961 = vmatprep.subr.mxu0 0.0
    %962 = vmatpush1.xpose.msra.mxu0 0.0
    %963 = vmatprep.mubr.f32.mxu0 0.0
    %964 = vmatmul.mubr.f32.gmra.mrb[0].mxu0 %v893
    %v965 = vpop.f32.mrb[0].mxu0
    %v966 = vadd.f32 0.0, %v965
    %v967 = vpop.f32.mrb[0].mxu0
    %968 = vmatprep.mubr.f32.mxu0 0.0
    %969 = vmatmul.mubr.f32.gmra.mrb[0].mxu0 %v895
    %v970 = vpop.f32.mrb[0].mxu0
    %v971 = vadd.f32 0.0, %v970
    %v972 = vpop.f32.mrb[0].mxu0
    %973 = vdwg.mxu0
    %v974 = vsel %vm649, %v600, 0
    %v976 = vsel %vm649, %v602, 0
    %v978 = vsel %vm649, %v622, 0
    %980 = vmatprep.subr.mxu0 0.0
    %981 = vmatpush1.xpose.msra.mxu0 %v978
    %982 = vmatprep.subr.mxu0 0.0
    %983 = vmatpush1.xpose.msra.mxu0 0.0
    %984 = vmatprep.subr.mxu0 0.0
    %985 = vmatpush1.xpose.msra.mxu0 0.0
    %986 = vmatprep.subr.mxu0 0.0
    %987 = vmatpush1.xpose.msra.mxu0 0.0
    %988 = vmatprep.subr.mxu0 0.0
    %989 = vmatpush1.xpose.msra.mxu0 0.0
    %990 = vmatprep.subr.mxu0 0.0
    %991 = vmatpush1.xpose.msra.mxu0 0.0
    %992 = vmatprep.subr.mxu0 0.0
    %993 = vmatpush1.xpose.msra.mxu0 0.0
    %994 = vmatprep.subr.mxu0 0.0
    %995 = vmatpush1.xpose.msra.mxu0 0.0
    %996 = vmatprep.subr.mxu0 0.0
    %997 = vmatpush1.xpose.msra.mxu0 0.0
    %998 = vmatprep.subr.mxu0 0.0
    %999 = vmatpush1.xpose.msra.mxu0 0.0
    %1000 = vmatprep.subr.mxu0 0.0
    %1001 = vmatpush1.xpose.msra.mxu0 0.0
    %1002 = vmatprep.subr.mxu0 0.0
    %1003 = vmatpush1.xpose.msra.mxu0 0.0
    %1004 = vmatprep.subr.mxu0 0.0
    %1005 = vmatpush1.xpose.msra.mxu0 0.0
    %1006 = vmatprep.subr.mxu0 0.0
    %1007 = vmatpush1.xpose.msra.mxu0 0.0
    %1008 = vmatprep.subr.mxu0 0.0
    %1009 = vmatpush1.xpose.msra.mxu0 0.0
    %1010 = vmatprep.subr.mxu0 0.0
    %1011 = vmatpush1.xpose.msra.mxu0 0.0
    %1012 = vmatprep.subr.mxu0 0.0
    %1013 = vmatpush1.xpose.msra.mxu0 0.0
    %1014 = vmatprep.subr.mxu0 0.0
    %1015 = vmatpush1.xpose.msra.mxu0 0.0
    %1016 = vmatprep.subr.mxu0 0.0
    %1017 = vmatpush1.xpose.msra.mxu0 0.0
    %1018 = vmatprep.subr.mxu0 0.0
    %1019 = vmatpush1.xpose.msra.mxu0 0.0
    %1020 = vmatprep.subr.mxu0 0.0
    %1021 = vmatpush1.xpose.msra.mxu0 0.0
    %1022 = vmatprep.subr.mxu0 0.0
    %1023 = vmatpush1.xpose.msra.mxu0 0.0
    %1024 = vmatprep.subr.mxu0 0.0
    %1025 = vmatpush1.xpose.msra.mxu0 0.0
    %1026 = vmatprep.subr.mxu0 0.0
    %1027 = vmatpush1.xpose.msra.mxu0 0.0
    %1028 = vmatprep.subr.mxu0 0.0
    %1029 = vmatpush1.xpose.msra.mxu0 0.0
    %1030 = vmatprep.subr.mxu0 0.0
    %1031 = vmatpush1.xpose.msra.mxu0 0.0
    %1032 = vmatprep.subr.mxu0 0.0
    %1033 = vmatpush1.xpose.msra.mxu0 0.0
    %1034 = vmatprep.subr.mxu0 0.0
    %1035 = vmatpush1.xpose.msra.mxu0 0.0
    %1036 = vmatprep.subr.mxu0 0.0
    %1037 = vmatpush1.xpose.msra.mxu0 0.0
    %1038 = vmatprep.subr.mxu0 0.0
    %1039 = vmatpush1.xpose.msra.mxu0 0.0
    %1040 = vmatprep.subr.mxu0 0.0
    %1041 = vmatpush1.xpose.msra.mxu0 0.0
    %1042 = vmatprep.subr.mxu0 0.0
    %1043 = vmatpush1.xpose.msra.mxu0 0.0
    %1044 = vmatprep.mubr.f32.mxu0 0.0
    %1045 = vmatmul.mubr.f32.gmra.mrb[0].mxu0 %v974
    %v1046 = vpop.f32.mrb[0].mxu0
    %v1047 = vadd.f32 0.0, %v1046
    %v1048 = vpop.f32.mrb[0].mxu0
    %1049 = vmatprep.mubr.f32.mxu0 0.0
    %1050 = vmatmul.mubr.f32.gmra.mrb[0].mxu0 %v976
    %v1051 = vpop.f32.mrb[0].mxu0
    %v1052 = vadd.f32 0.0, %v1051
    %v1053 = vpop.f32.mrb[0].mxu0
    %1054 = vdwg.mxu0
    %v1055 = vsel %vm649, %v604, 0
    %v1057 = vsel %vm649, %v606, 0
    %v1059 = vsel %vm649, %v624, 0
    %1061 = vmatprep.subr.mxu0 0.0
    %1062 = vmatpush1.xpose.msra.mxu0 %v1059
    %1063 = vmatprep.subr.mxu0 0.0
    %1064 = vmatpush1.xpose.msra.mxu0 0.0
    %1065 = vmatprep.subr.mxu0 0.0
    %1066 = vmatpush1.xpose.msra.mxu0 0.0
    %1067 = vmatprep.subr.mxu0 0.0
    %1068 = vmatpush1.xpose.msra.mxu0 0.0
    %1069 = vmatprep.subr.mxu0 0.0
    %1070 = vmatpush1.xpose.msra.mxu0 0.0
    %1071 = vmatprep.subr.mxu0 0.0
    %1072 = vmatpush1.xpose.msra.mxu0 0.0
    %1073 = vmatprep.subr.mxu0 0.0
    %1074 = vmatpush1.xpose.msra.mxu0 0.0
    %1075 = vmatprep.subr.mxu0 0.0
    %1076 = vmatpush1.xpose.msra.mxu0 0.0
    %1077 = vmatprep.subr.mxu0 0.0
    %1078 = vmatpush1.xpose.msra.mxu0 0.0
    %1079 = vmatprep.subr.mxu0 0.0
    %1080 = vmatpush1.xpose.msra.mxu0 0.0
    %1081 = vmatprep.subr.mxu0 0.0
    %1082 = vmatpush1.xpose.msra.mxu0 0.0
    %1083 = vmatprep.subr.mxu0 0.0
    %1084 = vmatpush1.xpose.msra.mxu0 0.0
    %1085 = vmatprep.subr.mxu0 0.0
    %1086 = vmatpush1.xpose.msra.mxu0 0.0
    %1087 = vmatprep.subr.mxu0 0.0
    %1088 = vmatpush1.xpose.msra.mxu0 0.0
    %1089 = vmatprep.subr.mxu0 0.0
    %1090 = vmatpush1.xpose.msra.mxu0 0.0
    %1091 = vmatprep.subr.mxu0 0.0
    %1092 = vmatpush1.xpose.msra.mxu0 0.0
    %1093 = vmatprep.subr.mxu0 0.0
    %1094 = vmatpush1.xpose.msra.mxu0 0.0
    %1095 = vmatprep.subr.mxu0 0.0
    %1096 = vmatpush1.xpose.msra.mxu0 0.0
    %1097 = vmatprep.subr.mxu0 0.0
    %1098 = vmatpush1.xpose.msra.mxu0 0.0
    %1099 = vmatprep.subr.mxu0 0.0
    %1100 = vmatpush1.xpose.msra.mxu0 0.0
    %1101 = vmatprep.subr.mxu0 0.0
    %1102 = vmatpush1.xpose.msra.mxu0 0.0
    %1103 = vmatprep.subr.mxu0 0.0
    %1104 = vmatpush1.xpose.msra.mxu0 0.0
    %1105 = vmatprep.subr.mxu0 0.0
    %1106 = vmatpush1.xpose.msra.mxu0 0.0
    %1107 = vmatprep.subr.mxu0 0.0
    %1108 = vmatpush1.xpose.msra.mxu0 0.0
    %1109 = vmatprep.subr.mxu0 0.0
    %1110 = vmatpush1.xpose.msra.mxu0 0.0
    %1111 = vmatprep.subr.mxu0 0.0
    %1112 = vmatpush1.xpose.msra.mxu0 0.0
    %1113 = vmatprep.subr.mxu0 0.0
    %1114 = vmatpush1.xpose.msra.mxu0 0.0
    %1115 = vmatprep.subr.mxu0 0.0
    %1116 = vmatpush1.xpose.msra.mxu0 0.0
    %1117 = vmatprep.subr.mxu0 0.0
    %1118 = vmatpush1.xpose.msra.mxu0 0.0
    %1119 = vmatprep.subr.mxu0 0.0
    %1120 = vmatpush1.xpose.msra.mxu0 0.0
    %1121 = vmatprep.subr.mxu0 0.0
    %1122 = vmatpush1.xpose.msra.mxu0 0.0
    %1123 = vmatprep.subr.mxu0 0.0
    %1124 = vmatpush1.xpose.msra.mxu0 0.0
    %1125 = vmatprep.mubr.f32.mxu0 0.0
    %1126 = vmatmul.mubr.f32.gmra.mrb[0].mxu0 %v1055
    %v1127 = vpop.f32.mrb[0].mxu0
    %v1128 = vadd.f32 0.0, %v1127
    %v1129 = vpop.f32.mrb[0].mxu0
    %1130 = vmatprep.mubr.f32.mxu0 0.0
    %1131 = vmatmul.mubr.f32.gmra.mrb[0].mxu0 %v1057
    %v1132 = vpop.f32.mrb[0].mxu0
    %v1133 = vadd.f32 0.0, %v1132
    %v1134 = vpop.f32.mrb[0].mxu0
    %1135 = vdwg.mxu0
    %v1136 = vsel %vm649, %v608, 0
    %v1138 = vsel %vm649, %v610, 0
    %v1140 = vsel %vm649, %v626, 0
    %1142 = vmatprep.subr.mxu0 0.0
    %1143 = vmatpush1.xpose.msra.mxu0 %v1140
    %1144 = vmatprep.subr.mxu0 0.0
    %1145 = vmatpush1.xpose.msra.mxu0 0.0
    %1146 = vmatprep.subr.mxu0 0.0
    %1147 = vmatpush1.xpose.msra.mxu0 0.0
    %1148 = vmatprep.subr.mxu0 0.0
    %1149 = vmatpush1.xpose.msra.mxu0 0.0
    %1150 = vmatprep.subr.mxu0 0.0
    %1151 = vmatpush1.xpose.msra.mxu0 0.0
    %1152 = vmatprep.subr.mxu0 0.0
    %1153 = vmatpush1.xpose.msra.mxu0 0.0
    %1154 = vmatprep.subr.mxu0 0.0
    %1155 = vmatpush1.xpose.msra.mxu0 0.0
    %1156 = vmatprep.subr.mxu0 0.0
    %1157 = vmatpush1.xpose.msra.mxu0 0.0
    %1158 = vmatprep.subr.mxu0 0.0
    %1159 = vmatpush1.xpose.msra.mxu0 0.0
    %1160 = vmatprep.subr.mxu0 0.0
    %1161 = vmatpush1.xpose.msra.mxu0 0.0
    %1162 = vmatprep.subr.mxu0 0.0
    %1163 = vmatpush1.xpose.msra.mxu0 0.0
    %1164 = vmatprep.subr.mxu0 0.0
    %1165 = vmatpush1.xpose.msra.mxu0 0.0
    %1166 = vmatprep.subr.mxu0 0.0
    %1167 = vmatpush1.xpose.msra.mxu0 0.0
    %1168 = vmatprep.subr.mxu0 0.0
    %1169 = vmatpush1.xpose.msra.mxu0 0.0
    %1170 = vmatprep.subr.mxu0 0.0
    %1171 = vmatpush1.xpose.msra.mxu0 0.0
    %1172 = vmatprep.subr.mxu0 0.0
    %1173 = vmatpush1.xpose.msra.mxu0 0.0
    %1174 = vmatprep.subr.mxu0 0.0
    %1175 = vmatpush1.xpose.msra.mxu0 0.0
    %1176 = vmatprep.subr.mxu0 0.0
    %1177 = vmatpush1.xpose.msra.mxu0 0.0
    %1178 = vmatprep.subr.mxu0 0.0
    %1179 = vmatpush1.xpose.msra.mxu0 0.0
    %1180 = vmatprep.subr.mxu0 0.0
    %1181 = vmatpush1.xpose.msra.mxu0 0.0
    %1182 = vmatprep.subr.mxu0 0.0
    %1183 = vmatpush1.xpose.msra.mxu0 0.0
    %1184 = vmatprep.subr.mxu0 0.0
    %1185 = vmatpush1.xpose.msra.mxu0 0.0
    %1186 = vmatprep.subr.mxu0 0.0
    %1187 = vmatpush1.xpose.msra.mxu0 0.0
    %1188 = vmatprep.subr.mxu0 0.0
    %1189 = vmatpush1.xpose.msra.mxu0 0.0
    %1190 = vmatprep.subr.mxu0 0.0
    %1191 = vmatpush1.xpose.msra.mxu0 0.0
    %1192 = vmatprep.subr.mxu0 0.0
    %1193 = vmatpush1.xpose.msra.mxu0 0.0
    %1194 = vmatprep.subr.mxu0 0.0
    %1195 = vmatpush1.xpose.msra.mxu0 0.0
    %1196 = vmatprep.subr.mxu0 0.0
    %1197 = vmatpush1.xpose.msra.mxu0 0.0
    %1198 = vmatprep.subr.mxu0 0.0
    %1199 = vmatpush1.xpose.msra.mxu0 0.0
    %1200 = vmatprep.subr.mxu0 0.0
    %1201 = vmatpush1.xpose.msra.mxu0 0.0
    %1202 = vmatprep.subr.mxu0 0.0
    %1203 = vmatpush1.xpose.msra.mxu0 0.0
    %1204 = vmatprep.subr.mxu0 0.0
    %1205 = vmatpush1.xpose.msra.mxu0 0.0
    %1206 = vmatprep.mubr.f32.mxu0 0.0
    %1207 = vmatmul.mubr.f32.gmra.mrb[0].mxu0 %v1136
    %v1208 = vpop.f32.mrb[0].mxu0
    %v1209 = vadd.f32 0.0, %v1208
    %v1210 = vpop.f32.mrb[0].mxu0
    %1211 = vmatprep.mubr.f32.mxu0 0.0
    %1212 = vmatmul.mubr.f32.gmra.mrb[0].mxu0 %v1138
    %v1213 = vpop.f32.mrb[0].mxu0
    %v1214 = vadd.f32 0.0, %v1213
    %v1215 = vpop.f32.mrb[0].mxu0
    %1216 = vdwg.mxu0
    %v1217 = vsel %vm649, %v612, 0
    %v1219 = vsel %vm649, %v614, 0
    %v1221 = vsel %vm649, %v628, 0
    %1223 = vmatprep.subr.mxu0 0.0
    %1224 = vmatpush1.xpose.msra.mxu0 %v1221
    %1225 = vmatprep.subr.mxu0 0.0
    %1226 = vmatpush1.xpose.msra.mxu0 0.0
    %1227 = vmatprep.subr.mxu0 0.0
    %1228 = vmatpush1.xpose.msra.mxu0 0.0
    %1229 = vmatprep.subr.mxu0 0.0
    %1230 = vmatpush1.xpose.msra.mxu0 0.0
    %1231 = vmatprep.subr.mxu0 0.0
    %1232 = vmatpush1.xpose.msra.mxu0 0.0
    %1233 = vmatprep.subr.mxu0 0.0
    %1234 = vmatpush1.xpose.msra.mxu0 0.0
    %1235 = vmatprep.subr.mxu0 0.0
    %1236 = vmatpush1.xpose.msra.mxu0 0.0
    %1237 = vmatprep.subr.mxu0 0.0
    %1238 = vmatpush1.xpose.msra.mxu0 0.0
    %1239 = vmatprep.subr.mxu0 0.0
    %1240 = vmatpush1.xpose.msra.mxu0 0.0
    %1241 = vmatprep.subr.mxu0 0.0
    %1242 = vmatpush1.xpose.msra.mxu0 0.0
    %1243 = vmatprep.subr.mxu0 0.0
    %1244 = vmatpush1.xpose.msra.mxu0 0.0
    %1245 = vmatprep.subr.mxu0 0.0
    %1246 = vmatpush1.xpose.msra.mxu0 0.0
    %1247 = vmatprep.subr.mxu0 0.0
    %1248 = vmatpush1.xpose.msra.mxu0 0.0
    %1249 = vmatprep.subr.mxu0 0.0
    %1250 = vmatpush1.xpose.msra.mxu0 0.0
    %1251 = vmatprep.subr.mxu0 0.0
    %1252 = vmatpush1.xpose.msra.mxu0 0.0
    %1253 = vmatprep.subr.mxu0 0.0
    %1254 = vmatpush1.xpose.msra.mxu0 0.0
    %1255 = vmatprep.subr.mxu0 0.0
    %1256 = vmatpush1.xpose.msra.mxu0 0.0
    %1257 = vmatprep.subr.mxu0 0.0
    %1258 = vmatpush1.xpose.msra.mxu0 0.0
    %1259 = vmatprep.subr.mxu0 0.0
    %1260 = vmatpush1.xpose.msra.mxu0 0.0
    %1261 = vmatprep.subr.mxu0 0.0
    %1262 = vmatpush1.xpose.msra.mxu0 0.0
    %1263 = vmatprep.subr.mxu0 0.0
    %1264 = vmatpush1.xpose.msra.mxu0 0.0
    %1265 = vmatprep.subr.mxu0 0.0
    %1266 = vmatpush1.xpose.msra.mxu0 0.0
    %1267 = vmatprep.subr.mxu0 0.0
    %1268 = vmatpush1.xpose.msra.mxu0 0.0
    %1269 = vmatprep.subr.mxu0 0.0
    %1270 = vmatpush1.xpose.msra.mxu0 0.0
    %1271 = vmatprep.subr.mxu0 0.0
    %1272 = vmatpush1.xpose.msra.mxu0 0.0
    %1273 = vmatprep.subr.mxu0 0.0
    %1274 = vmatpush1.xpose.msra.mxu0 0.0
    %1275 = vmatprep.subr.mxu0 0.0
    %1276 = vmatpush1.xpose.msra.mxu0 0.0
    %1277 = vmatprep.subr.mxu0 0.0
    %1278 = vmatpush1.xpose.msra.mxu0 0.0
    %1279 = vmatprep.subr.mxu0 0.0
    %1280 = vmatpush1.xpose.msra.mxu0 0.0
    %1281 = vmatprep.subr.mxu0 0.0
    %1282 = vmatpush1.xpose.msra.mxu0 0.0
    %1283 = vmatprep.subr.mxu0 0.0
    %1284 = vmatpush1.xpose.msra.mxu0 0.0
    %1285 = vmatprep.subr.mxu0 0.0
    %1286 = vmatpush1.xpose.msra.mxu0 0.0
    %1287 = vmatprep.mubr.f32.mxu0 0.0
    %1288 = vmatmul.mubr.f32.gmra.mrb[0].mxu0 %v1217
    %v1289 = vpop.f32.mrb[0].mxu0
    %v1290 = vadd.f32 0.0, %v1289
    %v1291 = vpop.f32.mrb[0].mxu0
    %1292 = vmatprep.mubr.f32.mxu0 0.0
    %1293 = vmatmul.mubr.f32.gmra.mrb[0].mxu0 %v1219
    %v1294 = vpop.f32.mrb[0].mxu0
    %v1295 = vadd.f32 0.0, %v1294
    %v1296 = vpop.f32.mrb[0].mxu0
    %1297 = vdwg.mxu0
    %v1298 = vsel %vm235, %v723, -inf
    %1299 = vmax.xlane.f32.xlu0 %v1298
    %v1300 = vpop.xlane.xlu0 %1299
    %v1301 = vsel %vm235, %v728, -inf
    %1302 = vmax.xlane.f32.xlu0 %v1301
    %v1303 = vpop.xlane.xlu0 %1302
    %v1304 = vsel %vm235, %v804, -inf
    %1305 = vmax.xlane.f32.xlu0 %v1304
    %v1306 = vpop.xlane.xlu0 %1305
    %v1307 = vsel %vm235, %v809, -inf
    %1308 = vmax.xlane.f32.xlu0 %v1307
    %v1309 = vpop.xlane.xlu0 %1308
    %v1310 = vsel %vm235, %v885, -inf
    %1311 = vmax.xlane.f32.xlu0 %v1310
    %v1312 = vpop.xlane.xlu0 %1311
    %v1313 = vsel %vm235, %v890, -inf
    %1314 = vmax.xlane.f32.xlu0 %v1313
    %v1315 = vpop.xlane.xlu0 %1314
    %v1316 = vsel %vm235, %v966, -inf
    %1317 = vmax.xlane.f32.xlu0 %v1316
    %v1318 = vpop.xlane.xlu0 %1317
    %v1319 = vsel %vm235, %v971, -inf
    %1320 = vmax.xlane.f32.xlu0 %v1319
    %v1321 = vpop.xlane.xlu0 %1320
    %v1322 = vsel %vm235, %v1047, -inf
    %1323 = vmax.xlane.f32.xlu0 %v1322
    %v1324 = vpop.xlane.xlu0 %1323
    %v1325 = vsel %vm235, %v1052, -inf
    %1326 = vmax.xlane.f32.xlu0 %v1325
    %v1327 = vpop.xlane.xlu0 %1326
    %v1328 = vsel %vm235, %v1128, -inf
    %1329 = vmax.xlane.f32.xlu0 %v1328
    %v1330 = vpop.xlane.xlu0 %1329
    %v1331 = vsel %vm235, %v1133, -inf
    %1332 = vmax.xlane.f32.xlu0 %v1331
    %v1333 = vpop.xlane.xlu0 %1332
    %v1334 = vsel %vm235, %v1209, -inf
    %1335 = vmax.xlane.f32.xlu0 %v1334
    %v1336 = vpop.xlane.xlu0 %1335
    %v1337 = vsel %vm235, %v1214, -inf
    %1338 = vmax.xlane.f32.xlu0 %v1337
    %v1339 = vpop.xlane.xlu0 %1338
    %v1340 = vsel %vm235, %v1290, -inf
    %1341 = vmax.xlane.f32.xlu0 %v1340
    %v1342 = vpop.xlane.xlu0 %1341
    %v1343 = vsel %vm235, %v1295, -inf
    %1344 = vmax.xlane.f32.xlu0 %v1343
    %v1345 = vpop.xlane.xlu0 %1344
    %v1346 = vsub.f32 %v723, %v1300
    %v1347 = vsub.f32 %v728, %v1303
    %v1348 = vsub.f32 %v804, %v1306
    %v1349 = vsub.f32 %v809, %v1309
    %v1350 = vsub.f32 %v885, %v1312
    %v1351 = vsub.f32 %v890, %v1315
    %v1352 = vsub.f32 %v966, %v1318
    %v1353 = vsub.f32 %v971, %v1321
    %v1354 = vsub.f32 %v1047, %v1324
    %v1355 = vsub.f32 %v1052, %v1327
    %v1356 = vsub.f32 %v1128, %v1330
    %v1357 = vsub.f32 %v1133, %v1333
    %v1358 = vsub.f32 %v1209, %v1336
    %v1359 = vsub.f32 %v1214, %v1339
    %v1360 = vsub.f32 %v1290, %v1342
    %v1361 = vsub.f32 %v1295, %v1345
    %v1362 = vmul.f32 %v1346, 1.442695
    %v1363 = vpow.pop %v1362
    %v1364 = vmul.f32 %v1347, 1.442695
    %v1365 = vpow.pop %v1364
    %v1366 = vmul.f32 %v1348, 1.442695
    %v1367 = vpow.pop %v1366
    %v1368 = vmul.f32 %v1349, 1.442695
    %v1369 = vpow.pop %v1368
    %v1370 = vmul.f32 %v1350, 1.442695
    %v1371 = vpow.pop %v1370
    %v1372 = vmul.f32 %v1351, 1.442695
    %v1373 = vpow.pop %v1372
    %v1374 = vmul.f32 %v1352, 1.442695
    %v1375 = vpow.pop %v1374
    %v1376 = vmul.f32 %v1353, 1.442695
    %v1377 = vpow.pop %v1376
    %v1378 = vmul.f32 %v1354, 1.442695
    %v1379 = vpow.pop %v1378
    %v1380 = vmul.f32 %v1355, 1.442695
    %v1381 = vpow.pop %v1380
    %v1382 = vmul.f32 %v1356, 1.442695
    %v1383 = vpow.pop %v1382
    %v1384 = vmul.f32 %v1357, 1.442695
    %v1385 = vpow.pop %v1384
    %v1386 = vmul.f32 %v1358, 1.442695
    %v1387 = vpow.pop %v1386
    %v1388 = vmul.f32 %v1359, 1.442695
    %v1389 = vpow.pop %v1388
    %v1390 = vmul.f32 %v1360, 1.442695
    %v1391 = vpow.pop %v1390
    %v1392 = vmul.f32 %v1361, 1.442695
    %v1393 = vpow.pop %v1392
    %v1394 = vsel %vm235, %v1363, 0.0
    %1395 = vadd.xlane.f32.xlu0 %v1394
    %v1396 = vpop.xlane.xlu0 %1395
    %v1397 = vsel %vm235, %v1365, 0.0
    %1398 = vadd.xlane.f32.xlu0 %v1397
    %v1399 = vpop.xlane.xlu0 %1398
    %v1400 = vsel %vm235, %v1367, 0.0
    %1401 = vadd.xlane.f32.xlu0 %v1400
    %v1402 = vpop.xlane.xlu0 %1401
    %v1403 = vsel %vm235, %v1369, 0.0
    %1404 = vadd.xlane.f32.xlu0 %v1403
    %v1405 = vpop.xlane.xlu0 %1404
    %v1406 = vsel %vm235, %v1371, 0.0
    %1407 = vadd.xlane.f32.xlu0 %v1406
    %v1408 = vpop.xlane.xlu0 %1407
    %v1409 = vsel %vm235, %v1373, 0.0
    %1410 = vadd.xlane.f32.xlu0 %v1409
    %v1411 = vpop.xlane.xlu0 %1410
    %v1412 = vsel %vm235, %v1375, 0.0
    %1413 = vadd.xlane.f32.xlu0 %v1412
    %v1414 = vpop.xlane.xlu0 %1413
    %v1415 = vsel %vm235, %v1377, 0.0
    %1416 = vadd.xlane.f32.xlu0 %v1415
    %v1417 = vpop.xlane.xlu0 %1416
    %v1418 = vsel %vm235, %v1379, 0.0
    %1419 = vadd.xlane.f32.xlu0 %v1418
    %v1420 = vpop.xlane.xlu0 %1419
    %v1421 = vsel %vm235, %v1381, 0.0
    %1422 = vadd.xlane.f32.xlu0 %v1421
    %v1423 = vpop.xlane.xlu0 %1422
    %v1424 = vsel %vm235, %v1383, 0.0
    %1425 = vadd.xlane.f32.xlu0 %v1424
    %v1426 = vpop.xlane.xlu0 %1425
    %v1427 = vsel %vm235, %v1385, 0.0
    %1428 = vadd.xlane.f32.xlu0 %v1427
    %v1429 = vpop.xlane.xlu0 %1428
    %v1430 = vsel %vm235, %v1387, 0.0
    %1431 = vadd.xlane.f32.xlu0 %v1430
    %v1432 = vpop.xlane.xlu0 %1431
    %v1433 = vsel %vm235, %v1389, 0.0
    %1434 = vadd.xlane.f32.xlu0 %v1433
    %v1435 = vpop.xlane.xlu0 %1434
    %v1436 = vsel %vm235, %v1391, 0.0
    %1437 = vadd.xlane.f32.xlu0 %v1436
    %v1438 = vpop.xlane.xlu0 %1437
    %v1439 = vsel %vm235, %v1393, 0.0
    %1440 = vadd.xlane.f32.xlu0 %v1439
    %v1441 = vpop.xlane.xlu0 %1440
    %v1442 = vrcp.pop %v1396
    %v1443 = vrcp.pop %v1399
    %v1444 = vrcp.pop %v1402
    %v1445 = vrcp.pop %v1405
    %v1446 = vrcp.pop %v1408
    %v1447 = vrcp.pop %v1411
    %v1448 = vrcp.pop %v1414
    %v1449 = vrcp.pop %v1417
    %v1450 = vrcp.pop %v1420
    %v1451 = vrcp.pop %v1423
    %v1452 = vrcp.pop %v1426
    %v1453 = vrcp.pop %v1429
    %v1454 = vrcp.pop %v1432
    %v1455 = vrcp.pop %v1435
    %v1456 = vrcp.pop %v1438
    %v1457 = vrcp.pop %v1441
    %v1458 = vmul.f32 %v1363, %v1442
    %v1459 = vmul.f32 %v1365, %v1443
    %v1460 = vmul.f32 %v1367, %v1444
    %v1461 = vmul.f32 %v1369, %v1445
    %v1462 = vmul.f32 %v1371, %v1446
    %v1463 = vmul.f32 %v1373, %v1447
    %v1464 = vmul.f32 %v1375, %v1448
    %v1465 = vmul.f32 %v1377, %v1449
    %v1466 = vmul.f32 %v1379, %v1450
    %v1467 = vmul.f32 %v1381, %v1451
    %v1468 = vmul.f32 %v1383, %v1452
    %v1469 = vmul.f32 %v1385, %v1453
    %v1470 = vmul.f32 %v1387, %v1454
    %v1471 = vmul.f32 %v1389, %v1455
    %v1472 = vmul.f32 %v1391, %v1456
    %v1473 = vmul.f32 %v1393, %v1457
    %v1475 = vsel %vm235, %v1458, 0
    %v1478 = vsel %vm235, %v1459, 0
    %1480 = vmatprep.subr.mxu0 0.0
    %1481 = vmatpush1.msra.mxu0 %v579
    %1482 = vmatprep.subr.mxu0 0.0
    %1483 = vmatpush1.msra.mxu0 0.0
    %1484 = vmatprep.subr.mxu0 0.0
    %1485 = vmatpush1.msra.mxu0 0.0
    %1486 = vmatprep.subr.mxu0 0.0
    %1487 = vmatpush1.msra.mxu0 0.0
    %1488 = vmatprep.subr.mxu0 0.0
    %1489 = vmatpush1.msra.mxu0 0.0
    %1490 = vmatprep.subr.mxu0 0.0
    %1491 = vmatpush1.msra.mxu0 0.0
    %1492 = vmatprep.subr.mxu0 0.0
    %1493 = vmatpush1.msra.mxu0 0.0
    %1494 = vmatprep.subr.mxu0 0.0
    %1495 = vmatpush1.msra.mxu0 0.0
    %1496 = vmatprep.subr.mxu0 0.0
    %1497 = vmatpush1.msra.mxu0 0.0
    %1498 = vmatprep.subr.mxu0 0.0
    %1499 = vmatpush1.msra.mxu0 0.0
    %1500 = vmatprep.subr.mxu0 0.0
    %1501 = vmatpush1.msra.mxu0 0.0
    %1502 = vmatprep.subr.mxu0 0.0
    %1503 = vmatpush1.msra.mxu0 0.0
    %1504 = vmatprep.subr.mxu0 0.0
    %1505 = vmatpush1.msra.mxu0 0.0
    %1506 = vmatprep.subr.mxu0 0.0
    %1507 = vmatpush1.msra.mxu0 0.0
    %1508 = vmatprep.subr.mxu0 0.0
    %1509 = vmatpush1.msra.mxu0 0.0
    %1510 = vmatprep.subr.mxu0 0.0
    %1511 = vmatpush1.msra.mxu0 0.0
    %1512 = vmatprep.subr.mxu0 0.0
    %1513 = vmatpush1.msra.mxu0 0.0
    %1514 = vmatprep.subr.mxu0 0.0
    %1515 = vmatpush1.msra.mxu0 0.0
    %1516 = vmatprep.subr.mxu0 0.0
    %1517 = vmatpush1.msra.mxu0 0.0
    %1518 = vmatprep.subr.mxu0 0.0
    %1519 = vmatpush1.msra.mxu0 0.0
    %1520 = vmatprep.subr.mxu0 0.0
    %1521 = vmatpush1.msra.mxu0 0.0
    %1522 = vmatprep.subr.mxu0 0.0
    %1523 = vmatpush1.msra.mxu0 0.0
    %1524 = vmatprep.subr.mxu0 0.0
    %1525 = vmatpush1.msra.mxu0 0.0
    %1526 = vmatprep.subr.mxu0 0.0
    %1527 = vmatpush1.msra.mxu0 0.0
    %1528 = vmatprep.subr.mxu0 0.0
    %1529 = vmatpush1.msra.mxu0 0.0
    %1530 = vmatprep.subr.mxu0 0.0
    %1531 = vmatpush1.msra.mxu0 0.0
    %1532 = vmatprep.subr.mxu0 0.0
    %1533 = vmatpush1.msra.mxu0 0.0
    %1534 = vmatprep.subr.mxu0 0.0
    %1535 = vmatpush1.msra.mxu0 0.0
    %1536 = vmatprep.subr.mxu0 0.0
    %1537 = vmatpush1.msra.mxu0 0.0
    %1538 = vmatprep.subr.mxu0 0.0
    %1539 = vmatpush1.msra.mxu0 0.0
    %1540 = vmatprep.subr.mxu0 0.0
    %1541 = vmatpush1.msra.mxu0 0.0
    %1542 = vmatprep.subr.mxu0 0.0
    %1543 = vmatpush1.msra.mxu0 0.0
    %1544 = vmatprep.mubr.f32.mxu0 0.0
    %1545 = vmatmul.mubr.f32.gmra.mrb[0].mxu0 %v1475
    %v1546 = vpop.f32.mrb[0].mxu0
    %v1547 = vadd.f32 0.0, %v1546
    %v1548 = vpop.f32.mrb[0].mxu0
    %1549 = vmatprep.mubr.f32.mxu0 0.0
    %1550 = vmatmul.mubr.f32.gmra.mrb[0].mxu0 %v1478
    %v1551 = vpop.f32.mrb[0].mxu0
    %v1552 = vadd.f32 0.0, %v1551
    %v1553 = vpop.f32.mrb[0].mxu0
    %1554 = vdwg.mxu0
    %v1556 = vsel %vm235, %v1460, 0
    %v1559 = vsel %vm235, %v1461, 0
    %1561 = vmatprep.subr.mxu0 0.0
    %1562 = vmatpush1.msra.mxu0 %v584
    %1563 = vmatprep.subr.mxu0 0.0
    %1564 = vmatpush1.msra.mxu0 0.0
    %1565 = vmatprep.subr.mxu0 0.0
    %1566 = vmatpush1.msra.mxu0 0.0
    %1567 = vmatprep.subr.mxu0 0.0
    %1568 = vmatpush1.msra.mxu0 0.0
    %1569 = vmatprep.subr.mxu0 0.0
    %1570 = vmatpush1.msra.mxu0 0.0
    %1571 = vmatprep.subr.mxu0 0.0
    %1572 = vmatpush1.msra.mxu0 0.0
    %1573 = vmatprep.subr.mxu0 0.0
    %1574 = vmatpush1.msra.mxu0 0.0
    %1575 = vmatprep.subr.mxu0 0.0
    %1576 = vmatpush1.msra.mxu0 0.0
    %1577 = vmatprep.subr.mxu0 0.0
    %1578 = vmatpush1.msra.mxu0 0.0
    %1579 = vmatprep.subr.mxu0 0.0
    %1580 = vmatpush1.msra.mxu0 0.0
    %1581 = vmatprep.subr.mxu0 0.0
    %1582 = vmatpush1.msra.mxu0 0.0
    %1583 = vmatprep.subr.mxu0 0.0
    %1584 = vmatpush1.msra.mxu0 0.0
    %1585 = vmatprep.subr.mxu0 0.0
    %1586 = vmatpush1.msra.mxu0 0.0
    %1587 = vmatprep.subr.mxu0 0.0
    %1588 = vmatpush1.msra.mxu0 0.0
    %1589 = vmatprep.subr.mxu0 0.0
    %1590 = vmatpush1.msra.mxu0 0.0
    %1591 = vmatprep.subr.mxu0 0.0
    %1592 = vmatpush1.msra.mxu0 0.0
    %1593 = vmatprep.subr.mxu0 0.0
    %1594 = vmatpush1.msra.mxu0 0.0
    %1595 = vmatprep.subr.mxu0 0.0
    %1596 = vmatpush1.msra.mxu0 0.0
    %1597 = vmatprep.subr.mxu0 0.0
    %1598 = vmatpush1.msra.mxu0 0.0
    %1599 = vmatprep.subr.mxu0 0.0
    %1600 = vmatpush1.msra.mxu0 0.0
    %1601 = vmatprep.subr.mxu0 0.0
    %1602 = vmatpush1.msra.mxu0 0.0
    %1603 = vmatprep.subr.mxu0 0.0
    %1604 = vmatpush1.msra.mxu0 0.0
    %1605 = vmatprep.subr.mxu0 0.0
    %1606 = vmatpush1.msra.mxu0 0.0
    %1607 = vmatprep.subr.mxu0 0.0
    %1608 = vmatpush1.msra.mxu0 0.0
    %1609 = vmatprep.subr.mxu0 0.0
    %1610 = vmatpush1.msra.mxu0 0.0
    %1611 = vmatprep.subr.mxu0 0.0
    %1612 = vmatpush1.msra.mxu0 0.0
    %1613 = vmatprep.subr.mxu0 0.0
    %1614 = vmatpush1.msra.mxu0 0.0
    %1615 = vmatprep.subr.mxu0 0.0
    %1616 = vmatpush1.msra.mxu0 0.0
    %1617 = vmatprep.subr.mxu0 0.0
    %1618 = vmatpush1.msra.mxu0 0.0
    %1619 = vmatprep.subr.mxu0 0.0
    %1620 = vmatpush1.msra.mxu0 0.0
    %1621 = vmatprep.subr.mxu0 0.0
    %1622 = vmatpush1.msra.mxu0 0.0
    %1623 = vmatprep.subr.mxu0 0.0
    %1624 = vmatpush1.msra.mxu0 0.0
    %1625 = vmatprep.mubr.f32.mxu0 0.0
    %1626 = vmatmul.mubr.f32.gmra.mrb[0].mxu0 %v1556
    %v1627 = vpop.f32.mrb[0].mxu0
    %v1628 = vadd.f32 0.0, %v1627
    %v1629 = vpop.f32.mrb[0].mxu0
    %1630 = vmatprep.mubr.f32.mxu0 0.0
    %1631 = vmatmul.mubr.f32.gmra.mrb[0].mxu0 %v1559
    %v1632 = vpop.f32.mrb[0].mxu0
    %v1633 = vadd.f32 0.0, %v1632
    %v1634 = vpop.f32.mrb[0].mxu0
    %1635 = vdwg.mxu0
    %v1637 = vsel %vm235, %v1462, 0
    %v1640 = vsel %vm235, %v1463, 0
    %1642 = vmatprep.subr.mxu0 0.0
    %1643 = vmatpush1.msra.mxu0 %v632
    %1644 = vmatprep.subr.mxu0 0.0
    %1645 = vmatpush1.msra.mxu0 0.0
    %1646 = vmatprep.subr.mxu0 0.0
    %1647 = vmatpush1.msra.mxu0 0.0
    %1648 = vmatprep.subr.mxu0 0.0
    %1649 = vmatpush1.msra.mxu0 0.0
    %1650 = vmatprep.subr.mxu0 0.0
    %1651 = vmatpush1.msra.mxu0 0.0
    %1652 = vmatprep.subr.mxu0 0.0
    %1653 = vmatpush1.msra.mxu0 0.0
    %1654 = vmatprep.subr.mxu0 0.0
    %1655 = vmatpush1.msra.mxu0 0.0
    %1656 = vmatprep.subr.mxu0 0.0
    %1657 = vmatpush1.msra.mxu0 0.0
    %1658 = vmatprep.subr.mxu0 0.0
    %1659 = vmatpush1.msra.mxu0 0.0
    %1660 = vmatprep.subr.mxu0 0.0
    %1661 = vmatpush1.msra.mxu0 0.0
    %1662 = vmatprep.subr.mxu0 0.0
    %1663 = vmatpush1.msra.mxu0 0.0
    %1664 = vmatprep.subr.mxu0 0.0
    %1665 = vmatpush1.msra.mxu0 0.0
    %1666 = vmatprep.subr.mxu0 0.0
    %1667 = vmatpush1.msra.mxu0 0.0
    %1668 = vmatprep.subr.mxu0 0.0
    %1669 = vmatpush1.msra.mxu0 0.0
    %1670 = vmatprep.subr.mxu0 0.0
    %1671 = vmatpush1.msra.mxu0 0.0
    %1672 = vmatprep.subr.mxu0 0.0
    %1673 = vmatpush1.msra.mxu0 0.0
    %1674 = vmatprep.subr.mxu0 0.0
    %1675 = vmatpush1.msra.mxu0 0.0
    %1676 = vmatprep.subr.mxu0 0.0
    %1677 = vmatpush1.msra.mxu0 0.0
    %1678 = vmatprep.subr.mxu0 0.0
    %1679 = vmatpush1.msra.mxu0 0.0
    %1680 = vmatprep.subr.mxu0 0.0
    %1681 = vmatpush1.msra.mxu0 0.0
    %1682 = vmatprep.subr.mxu0 0.0
    %1683 = vmatpush1.msra.mxu0 0.0
    %1684 = vmatprep.subr.mxu0 0.0
    %1685 = vmatpush1.msra.mxu0 0.0
    %1686 = vmatprep.subr.mxu0 0.0
    %1687 = vmatpush1.msra.mxu0 0.0
    %1688 = vmatprep.subr.mxu0 0.0
    %1689 = vmatpush1.msra.mxu0 0.0
    %1690 = vmatprep.subr.mxu0 0.0
    %1691 = vmatpush1.msra.mxu0 0.0
    %1692 = vmatprep.subr.mxu0 0.0
    %1693 = vmatpush1.msra.mxu0 0.0
    %1694 = vmatprep.subr.mxu0 0.0
    %1695 = vmatpush1.msra.mxu0 0.0
    %1696 = vmatprep.subr.mxu0 0.0
    %1697 = vmatpush1.msra.mxu0 0.0
    %1698 = vmatprep.subr.mxu0 0.0
    %1699 = vmatpush1.msra.mxu0 0.0
    %1700 = vmatprep.subr.mxu0 0.0
    %1701 = vmatpush1.msra.mxu0 0.0
    %1702 = vmatprep.subr.mxu0 0.0
    %1703 = vmatpush1.msra.mxu0 0.0
    %1704 = vmatprep.subr.mxu0 0.0
    %1705 = vmatpush1.msra.mxu0 0.0
    %1706 = vmatprep.mubr.f32.mxu0 0.0
    %1707 = vmatmul.mubr.f32.gmra.mrb[0].mxu0 %v1637
    %v1708 = vpop.f32.mrb[0].mxu0
    %v1709 = vadd.f32 0.0, %v1708
    %v1710 = vpop.f32.mrb[0].mxu0
    %1711 = vmatprep.mubr.f32.mxu0 0.0
    %1712 = vmatmul.mubr.f32.gmra.mrb[0].mxu0 %v1640
    %v1713 = vpop.f32.mrb[0].mxu0
    %v1714 = vadd.f32 0.0, %v1713
    %v1715 = vpop.f32.mrb[0].mxu0
    %1716 = vdwg.mxu0
    %v1718 = vsel %vm235, %v1464, 0
    %v1721 = vsel %vm235, %v1465, 0
    %1723 = vmatprep.subr.mxu0 0.0
    %1724 = vmatpush1.msra.mxu0 %v634
    %1725 = vmatprep.subr.mxu0 0.0
    %1726 = vmatpush1.msra.mxu0 0.0
    %1727 = vmatprep.subr.mxu0 0.0
    %1728 = vmatpush1.msra.mxu0 0.0
    %1729 = vmatprep.subr.mxu0 0.0
    %1730 = vmatpush1.msra.mxu0 0.0
    %1731 = vmatprep.subr.mxu0 0.0
    %1732 = vmatpush1.msra.mxu0 0.0
    %1733 = vmatprep.subr.mxu0 0.0
    %1734 = vmatpush1.msra.mxu0 0.0
    %1735 = vmatprep.subr.mxu0 0.0
    %1736 = vmatpush1.msra.mxu0 0.0
    %1737 = vmatprep.subr.mxu0 0.0
    %1738 = vmatpush1.msra.mxu0 0.0
    %1739 = vmatprep.subr.mxu0 0.0
    %1740 = vmatpush1.msra.mxu0 0.0
    %1741 = vmatprep.subr.mxu0 0.0
    %1742 = vmatpush1.msra.mxu0 0.0
    %1743 = vmatprep.subr.mxu0 0.0
    %1744 = vmatpush1.msra.mxu0 0.0
    %1745 = vmatprep.subr.mxu0 0.0
    %1746 = vmatpush1.msra.mxu0 0.0
    %1747 = vmatprep.subr.mxu0 0.0
    %1748 = vmatpush1.msra.mxu0 0.0
    %1749 = vmatprep.subr.mxu0 0.0
    %1750 = vmatpush1.msra.mxu0 0.0
    %1751 = vmatprep.subr.mxu0 0.0
    %1752 = vmatpush1.msra.mxu0 0.0
    %1753 = vmatprep.subr.mxu0 0.0
    %1754 = vmatpush1.msra.mxu0 0.0
    %1755 = vmatprep.subr.mxu0 0.0
    %1756 = vmatpush1.msra.mxu0 0.0
    %1757 = vmatprep.subr.mxu0 0.0
    %1758 = vmatpush1.msra.mxu0 0.0
    %1759 = vmatprep.subr.mxu0 0.0
    %1760 = vmatpush1.msra.mxu0 0.0
    %1761 = vmatprep.subr.mxu0 0.0
    %1762 = vmatpush1.msra.mxu0 0.0
    %1763 = vmatprep.subr.mxu0 0.0
    %1764 = vmatpush1.msra.mxu0 0.0
    %1765 = vmatprep.subr.mxu0 0.0
    %1766 = vmatpush1.msra.mxu0 0.0
    %1767 = vmatprep.subr.mxu0 0.0
    %1768 = vmatpush1.msra.mxu0 0.0
    %1769 = vmatprep.subr.mxu0 0.0
    %1770 = vmatpush1.msra.mxu0 0.0
    %1771 = vmatprep.subr.mxu0 0.0
    %1772 = vmatpush1.msra.mxu0 0.0
    %1773 = vmatprep.subr.mxu0 0.0
    %1774 = vmatpush1.msra.mxu0 0.0
    %1775 = vmatprep.subr.mxu0 0.0
    %1776 = vmatpush1.msra.mxu0 0.0
    %1777 = vmatprep.subr.mxu0 0.0
    %1778 = vmatpush1.msra.mxu0 0.0
    %1779 = vmatprep.subr.mxu0 0.0
    %1780 = vmatpush1.msra.mxu0 0.0
    %1781 = vmatprep.subr.mxu0 0.0
    %1782 = vmatpush1.msra.mxu0 0.0
    %1783 = vmatprep.subr.mxu0 0.0
    %1784 = vmatpush1.msra.mxu0 0.0
    %1785 = vmatprep.subr.mxu0 0.0
    %1786 = vmatpush1.msra.mxu0 0.0
    %1787 = vmatprep.mubr.f32.mxu0 0.0
    %1788 = vmatmul.mubr.f32.gmra.mrb[0].mxu0 %v1718
    %v1789 = vpop.f32.mrb[0].mxu0
    %v1790 = vadd.f32 0.0, %v1789
    %v1791 = vpop.f32.mrb[0].mxu0
    %1792 = vmatprep.mubr.f32.mxu0 0.0
    %1793 = vmatmul.mubr.f32.gmra.mrb[0].mxu0 %v1721
    %v1794 = vpop.f32.mrb[0].mxu0
    %v1795 = vadd.f32 0.0, %v1794
    %v1796 = vpop.f32.mrb[0].mxu0
    %1797 = vdwg.mxu0
    %v1799 = vsel %vm235, %v1466, 0
    %v1802 = vsel %vm235, %v1467, 0
    %1804 = vmatprep.subr.mxu0 0.0
    %1805 = vmatpush1.msra.mxu0 %v638
    %1806 = vmatprep.subr.mxu0 0.0
    %1807 = vmatpush1.msra.mxu0 0.0
    %1808 = vmatprep.subr.mxu0 0.0
    %1809 = vmatpush1.msra.mxu0 0.0
    %1810 = vmatprep.subr.mxu0 0.0
    %1811 = vmatpush1.msra.mxu0 0.0
    %1812 = vmatprep.subr.mxu0 0.0
    %1813 = vmatpush1.msra.mxu0 0.0
    %1814 = vmatprep.subr.mxu0 0.0
    %1815 = vmatpush1.msra.mxu0 0.0
    %1816 = vmatprep.subr.mxu0 0.0
    %1817 = vmatpush1.msra.mxu0 0.0
    %1818 = vmatprep.subr.mxu0 0.0
    %1819 = vmatpush1.msra.mxu0 0.0
    %1820 = vmatprep.subr.mxu0 0.0
    %1821 = vmatpush1.msra.mxu0 0.0
    %1822 = vmatprep.subr.mxu0 0.0
    %1823 = vmatpush1.msra.mxu0 0.0
    %1824 = vmatprep.subr.mxu0 0.0
    %1825 = vmatpush1.msra.mxu0 0.0
    %1826 = vmatprep.subr.mxu0 0.0
    %1827 = vmatpush1.msra.mxu0 0.0
    %1828 = vmatprep.subr.mxu0 0.0
    %1829 = vmatpush1.msra.mxu0 0.0
    %1830 = vmatprep.subr.mxu0 0.0
    %1831 = vmatpush1.msra.mxu0 0.0
    %1832 = vmatprep.subr.mxu0 0.0
    %1833 = vmatpush1.msra.mxu0 0.0
    %1834 = vmatprep.subr.mxu0 0.0
    %1835 = vmatpush1.msra.mxu0 0.0
    %1836 = vmatprep.subr.mxu0 0.0
    %1837 = vmatpush1.msra.mxu0 0.0
    %1838 = vmatprep.subr.mxu0 0.0
    %1839 = vmatpush1.msra.mxu0 0.0
    %1840 = vmatprep.subr.mxu0 0.0
    %1841 = vmatpush1.msra.mxu0 0.0
    %1842 = vmatprep.subr.mxu0 0.0
    %1843 = vmatpush1.msra.mxu0 0.0
    %1844 = vmatprep.subr.mxu0 0.0
    %1845 = vmatpush1.msra.mxu0 0.0
    %1846 = vmatprep.subr.mxu0 0.0
    %1847 = vmatpush1.msra.mxu0 0.0
    %1848 = vmatprep.subr.mxu0 0.0
    %1849 = vmatpush1.msra.mxu0 0.0
    %1850 = vmatprep.subr.mxu0 0.0
    %1851 = vmatpush1.msra.mxu0 0.0
    %1852 = vmatprep.subr.mxu0 0.0
    %1853 = vmatpush1.msra.mxu0 0.0
    %1854 = vmatprep.subr.mxu0 0.0
    %1855 = vmatpush1.msra.mxu0 0.0
    %1856 = vmatprep.subr.mxu0 0.0
    %1857 = vmatpush1.msra.mxu0 0.0
    %1858 = vmatprep.subr.mxu0 0.0
    %1859 = vmatpush1.msra.mxu0 0.0
    %1860 = vmatprep.subr.mxu0 0.0
    %1861 = vmatpush1.msra.mxu0 0.0
    %1862 = vmatprep.subr.mxu0 0.0
    %1863 = vmatpush1.msra.mxu0 0.0
    %1864 = vmatprep.subr.mxu0 0.0
    %1865 = vmatpush1.msra.mxu0 0.0
    %1866 = vmatprep.subr.mxu0 0.0
    %1867 = vmatpush1.msra.mxu0 0.0
    %1868 = vmatprep.mubr.f32.mxu0 0.0
    %1869 = vmatmul.mubr.f32.gmra.mrb[0].mxu0 %v1799
    %v1870 = vpop.f32.mrb[0].mxu0
    %v1871 = vadd.f32 0.0, %v1870
    %v1872 = vpop.f32.mrb[0].mxu0
    %1873 = vmatprep.mubr.f32.mxu0 0.0
    %1874 = vmatmul.mubr.f32.gmra.mrb[0].mxu0 %v1802
    %v1875 = vpop.f32.mrb[0].mxu0
    %v1876 = vadd.f32 0.0, %v1875
    %v1877 = vpop.f32.mrb[0].mxu0
    %1878 = vdwg.mxu0
    %v1880 = vsel %vm235, %v1468, 0
    %v1883 = vsel %vm235, %v1469, 0
    %1885 = vmatprep.subr.mxu0 0.0
    %1886 = vmatpush1.msra.mxu0 %v640
    %1887 = vmatprep.subr.mxu0 0.0
    %1888 = vmatpush1.msra.mxu0 0.0
    %1889 = vmatprep.subr.mxu0 0.0
    %1890 = vmatpush1.msra.mxu0 0.0
    %1891 = vmatprep.subr.mxu0 0.0
    %1892 = vmatpush1.msra.mxu0 0.0
    %1893 = vmatprep.subr.mxu0 0.0
    %1894 = vmatpush1.msra.mxu0 0.0
    %1895 = vmatprep.subr.mxu0 0.0
    %1896 = vmatpush1.msra.mxu0 0.0
    %1897 = vmatprep.subr.mxu0 0.0
    %1898 = vmatpush1.msra.mxu0 0.0
    %1899 = vmatprep.subr.mxu0 0.0
    %1900 = vmatpush1.msra.mxu0 0.0
    %1901 = vmatprep.subr.mxu0 0.0
    %1902 = vmatpush1.msra.mxu0 0.0
    %1903 = vmatprep.subr.mxu0 0.0
    %1904 = vmatpush1.msra.mxu0 0.0
    %1905 = vmatprep.subr.mxu0 0.0
    %1906 = vmatpush1.msra.mxu0 0.0
    %1907 = vmatprep.subr.mxu0 0.0
    %1908 = vmatpush1.msra.mxu0 0.0
    %1909 = vmatprep.subr.mxu0 0.0
    %1910 = vmatpush1.msra.mxu0 0.0
    %1911 = vmatprep.subr.mxu0 0.0
    %1912 = vmatpush1.msra.mxu0 0.0
    %1913 = vmatprep.subr.mxu0 0.0
    %1914 = vmatpush1.msra.mxu0 0.0
    %1915 = vmatprep.subr.mxu0 0.0
    %1916 = vmatpush1.msra.mxu0 0.0
    %1917 = vmatprep.subr.mxu0 0.0
    %1918 = vmatpush1.msra.mxu0 0.0
    %1919 = vmatprep.subr.mxu0 0.0
    %1920 = vmatpush1.msra.mxu0 0.0
    %1921 = vmatprep.subr.mxu0 0.0
    %1922 = vmatpush1.msra.mxu0 0.0
    %1923 = vmatprep.subr.mxu0 0.0
    %1924 = vmatpush1.msra.mxu0 0.0
    %1925 = vmatprep.subr.mxu0 0.0
    %1926 = vmatpush1.msra.mxu0 0.0
    %1927 = vmatprep.subr.mxu0 0.0
    %1928 = vmatpush1.msra.mxu0 0.0
    %1929 = vmatprep.subr.mxu0 0.0
    %1930 = vmatpush1.msra.mxu0 0.0
    %1931 = vmatprep.subr.mxu0 0.0
    %1932 = vmatpush1.msra.mxu0 0.0
    %1933 = vmatprep.subr.mxu0 0.0
    %1934 = vmatpush1.msra.mxu0 0.0
    %1935 = vmatprep.subr.mxu0 0.0
    %1936 = vmatpush1.msra.mxu0 0.0
    %1937 = vmatprep.subr.mxu0 0.0
    %1938 = vmatpush1.msra.mxu0 0.0
    %1939 = vmatprep.subr.mxu0 0.0
    %1940 = vmatpush1.msra.mxu0 0.0
    %1941 = vmatprep.subr.mxu0 0.0
    %1942 = vmatpush1.msra.mxu0 0.0
    %1943 = vmatprep.subr.mxu0 0.0
    %1944 = vmatpush1.msra.mxu0 0.0
    %1945 = vmatprep.subr.mxu0 0.0
    %1946 = vmatpush1.msra.mxu0 0.0
    %1947 = vmatprep.subr.mxu0 0.0
    %1948 = vmatpush1.msra.mxu0 0.0
    %1949 = vmatprep.mubr.f32.mxu0 0.0
    %1950 = vmatmul.mubr.f32.gmra.mrb[0].mxu0 %v1880
    %v1951 = vpop.f32.mrb[0].mxu0
    %v1952 = vadd.f32 0.0, %v1951
    %v1953 = vpop.f32.mrb[0].mxu0
    %1954 = vmatprep.mubr.f32.mxu0 0.0
    %1955 = vmatmul.mubr.f32.gmra.mrb[0].mxu0 %v1883
    %v1956 = vpop.f32.mrb[0].mxu0
    %v1957 = vadd.f32 0.0, %v1956
    %v1958 = vpop.f32.mrb[0].mxu0
    %1959 = vdwg.mxu0
    %v1961 = vsel %vm235, %v1470, 0
    %v1964 = vsel %vm235, %v1471, 0
    %1966 = vmatprep.subr.mxu0 0.0
    %1967 = vmatpush1.msra.mxu0 %v644
    %1968 = vmatprep.subr.mxu0 0.0
    %1969 = vmatpush1.msra.mxu0 0.0
    %1970 = vmatprep.subr.mxu0 0.0
    %1971 = vmatpush1.msra.mxu0 0.0
    %1972 = vmatprep.subr.mxu0 0.0
    %1973 = vmatpush1.msra.mxu0 0.0
    %1974 = vmatprep.subr.mxu0 0.0
    %1975 = vmatpush1.msra.mxu0 0.0
    %1976 = vmatprep.subr.mxu0 0.0
    %1977 = vmatpush1.msra.mxu0 0.0
    %1978 = vmatprep.subr.mxu0 0.0
    %1979 = vmatpush1.msra.mxu0 0.0
    %1980 = vmatprep.subr.mxu0 0.0
    %1981 = vmatpush1.msra.mxu0 0.0
    %1982 = vmatprep.subr.mxu0 0.0
    %1983 = vmatpush1.msra.mxu0 0.0
    %1984 = vmatprep.subr.mxu0 0.0
    %1985 = vmatpush1.msra.mxu0 0.0
    %1986 = vmatprep.subr.mxu0 0.0
    %1987 = vmatpush1.msra.mxu0 0.0
    %1988 = vmatprep.subr.mxu0 0.0
    %1989 = vmatpush1.msra.mxu0 0.0
    %1990 = vmatprep.subr.mxu0 0.0
    %1991 = vmatpush1.msra.mxu0 0.0
    %1992 = vmatprep.subr.mxu0 0.0
    %1993 = vmatpush1.msra.mxu0 0.0
    %1994 = vmatprep.subr.mxu0 0.0
    %1995 = vmatpush1.msra.mxu0 0.0
    %1996 = vmatprep.subr.mxu0 0.0
    %1997 = vmatpush1.msra.mxu0 0.0
    %1998 = vmatprep.subr.mxu0 0.0
    %1999 = vmatpush1.msra.mxu0 0.0
    %2000 = vmatprep.subr.mxu0 0.0
    %2001 = vmatpush1.msra.mxu0 0.0
    %2002 = vmatprep.subr.mxu0 0.0
    %2003 = vmatpush1.msra.mxu0 0.0
    %2004 = vmatprep.subr.mxu0 0.0
    %2005 = vmatpush1.msra.mxu0 0.0
    %2006 = vmatprep.subr.mxu0 0.0
    %2007 = vmatpush1.msra.mxu0 0.0
    %2008 = vmatprep.subr.mxu0 0.0
    %2009 = vmatpush1.msra.mxu0 0.0
    %2010 = vmatprep.subr.mxu0 0.0
    %2011 = vmatpush1.msra.mxu0 0.0
    %2012 = vmatprep.subr.mxu0 0.0
    %2013 = vmatpush1.msra.mxu0 0.0
    %2014 = vmatprep.subr.mxu0 0.0
    %2015 = vmatpush1.msra.mxu0 0.0
    %2016 = vmatprep.subr.mxu0 0.0
    %2017 = vmatpush1.msra.mxu0 0.0
    %2018 = vmatprep.subr.mxu0 0.0
    %2019 = vmatpush1.msra.mxu0 0.0
    %2020 = vmatprep.subr.mxu0 0.0
    %2021 = vmatpush1.msra.mxu0 0.0
    %2022 = vmatprep.subr.mxu0 0.0
    %2023 = vmatpush1.msra.mxu0 0.0
    %2024 = vmatprep.subr.mxu0 0.0
    %2025 = vmatpush1.msra.mxu0 0.0
    %2026 = vmatprep.subr.mxu0 0.0
    %2027 = vmatpush1.msra.mxu0 0.0
    %2028 = vmatprep.subr.mxu0 0.0
    %2029 = vmatpush1.msra.mxu0 0.0
    %2030 = vmatprep.mubr.f32.mxu0 0.0
    %2031 = vmatmul.mubr.f32.gmra.mrb[0].mxu0 %v1961
    %v2032 = vpop.f32.mrb[0].mxu0
    %v2033 = vadd.f32 0.0, %v2032
    %v2034 = vpop.f32.mrb[0].mxu0
    %2035 = vmatprep.mubr.f32.mxu0 0.0
    %2036 = vmatmul.mubr.f32.gmra.mrb[0].mxu0 %v1964
    %v2037 = vpop.f32.mrb[0].mxu0
    %v2038 = vadd.f32 0.0, %v2037
    %v2039 = vpop.f32.mrb[0].mxu0
    %2040 = vdwg.mxu0
    %v2042 = vsel %vm235, %v1472, 0
    %v2045 = vsel %vm235, %v1473, 0
    %2047 = vmatprep.subr.mxu0 0.0
    %2048 = vmatpush1.msra.mxu0 %v646
    %2049 = vmatprep.subr.mxu0 0.0
    %2050 = vmatpush1.msra.mxu0 0.0
    %2051 = vmatprep.subr.mxu0 0.0
    %2052 = vmatpush1.msra.mxu0 0.0
    %2053 = vmatprep.subr.mxu0 0.0
    %2054 = vmatpush1.msra.mxu0 0.0
    %2055 = vmatprep.subr.mxu0 0.0
    %2056 = vmatpush1.msra.mxu0 0.0
    %2057 = vmatprep.subr.mxu0 0.0
    %2058 = vmatpush1.msra.mxu0 0.0
    %2059 = vmatprep.subr.mxu0 0.0
    %2060 = vmatpush1.msra.mxu0 0.0
    %2061 = vmatprep.subr.mxu0 0.0
    %2062 = vmatpush1.msra.mxu0 0.0
    %2063 = vmatprep.subr.mxu0 0.0
    %2064 = vmatpush1.msra.mxu0 0.0
    %2065 = vmatprep.subr.mxu0 0.0
    %2066 = vmatpush1.msra.mxu0 0.0
    %2067 = vmatprep.subr.mxu0 0.0
    %2068 = vmatpush1.msra.mxu0 0.0
    %2069 = vmatprep.subr.mxu0 0.0
    %2070 = vmatpush1.msra.mxu0 0.0
    %2071 = vmatprep.subr.mxu0 0.0
    %2072 = vmatpush1.msra.mxu0 0.0
    %2073 = vmatprep.subr.mxu0 0.0
    %2074 = vmatpush1.msra.mxu0 0.0
    %2075 = vmatprep.subr.mxu0 0.0
    %2076 = vmatpush1.msra.mxu0 0.0
    %2077 = vmatprep.subr.mxu0 0.0
    %2078 = vmatpush1.msra.mxu0 0.0
    %2079 = vmatprep.subr.mxu0 0.0
    %2080 = vmatpush1.msra.mxu0 0.0
    %2081 = vmatprep.subr.mxu0 0.0
    %2082 = vmatpush1.msra.mxu0 0.0
    %2083 = vmatprep.subr.mxu0 0.0
    %2084 = vmatpush1.msra.mxu0 0.0
    %2085 = vmatprep.subr.mxu0 0.0
    %2086 = vmatpush1.msra.mxu0 0.0
    %2087 = vmatprep.subr.mxu0 0.0
    %2088 = vmatpush1.msra.mxu0 0.0
    %2089 = vmatprep.subr.mxu0 0.0
    %2090 = vmatpush1.msra.mxu0 0.0
    %2091 = vmatprep.subr.mxu0 0.0
    %2092 = vmatpush1.msra.mxu0 0.0
    %2093 = vmatprep.subr.mxu0 0.0
    %2094 = vmatpush1.msra.mxu0 0.0
    %2095 = vmatprep.subr.mxu0 0.0
    %2096 = vmatpush1.msra.mxu0 0.0
    %2097 = vmatprep.subr.mxu0 0.0
    %2098 = vmatpush1.msra.mxu0 0.0
    %2099 = vmatprep.subr.mxu0 0.0
    %2100 = vmatpush1.msra.mxu0 0.0
    %2101 = vmatprep.subr.mxu0 0.0
    %2102 = vmatpush1.msra.mxu0 0.0
    %2103 = vmatprep.subr.mxu0 0.0
    %2104 = vmatpush1.msra.mxu0 0.0
    %2105 = vmatprep.subr.mxu0 0.0
    %2106 = vmatpush1.msra.mxu0 0.0
    %2107 = vmatprep.subr.mxu0 0.0
    %2108 = vmatpush1.msra.mxu0 0.0
    %2109 = vmatprep.subr.mxu0 0.0
    %2110 = vmatpush1.msra.mxu0 0.0
    %2111 = vmatprep.mubr.f32.mxu0 0.0
    %2112 = vmatmul.mubr.f32.gmra.mrb[0].mxu0 %v2042
    %v2113 = vpop.f32.mrb[0].mxu0
    %v2114 = vadd.f32 0.0, %v2113
    %v2115 = vpop.f32.mrb[0].mxu0
    %2116 = vmatprep.mubr.f32.mxu0 0.0
    %2117 = vmatmul.mubr.f32.gmra.mrb[0].mxu0 %v2045
    %v2118 = vpop.f32.mrb[0].mxu0
    %v2119 = vadd.f32 0.0, %v2118
    %v2120 = vpop.f32.mrb[0].mxu0
    %2121 = vdwg.mxu0
    %2126 = vrot.lane.b32.xlu0 %v1709, 8
    %v2127 = vpop.permute.xlu0 %2126
    %2128 = vrot.lane.b32.xlu0 %v1714, 8
    %v2129 = vpop.permute.xlu0 %2128
    %2130 = vrot.lane.b32.xlu0 %v1790, 8
    %v2131 = vpop.permute.xlu0 %2130
    %2132 = vrot.lane.b32.xlu0 %v1795, 8
    %v2133 = vpop.permute.xlu0 %2132
    %2142 = vrot.lane.b32.xlu0 %v1871, 16
    %v2143 = vpop.permute.xlu0 %2142
    %2144 = vrot.lane.b32.xlu0 %v1876, 16
    %v2145 = vpop.permute.xlu0 %2144
    %2146 = vrot.lane.b32.xlu0 %v1952, 16
    %v2147 = vpop.permute.xlu0 %2146
    %2148 = vrot.lane.b32.xlu0 %v1957, 16
    %v2149 = vpop.permute.xlu0 %2148
    %2158 = vrot.lane.b32.xlu0 %v2033, 24
    %v2159 = vpop.permute.xlu0 %2158
    %2160 = vrot.lane.b32.xlu0 %v2038, 24
    %v2161 = vpop.permute.xlu0 %2160
    %2162 = vrot.lane.b32.xlu0 %v2114, 24
    %v2163 = vpop.permute.xlu0 %2162
    %2164 = vrot.lane.b32.xlu0 %v2119, 24
    %v2165 = vpop.permute.xlu0 %2164
    %v2170 = vsel %vm235, %v1547, %v2127
    %v2171 = vsel %vm235, %v1552, %v2129
    %v2172 = vsel %vm235, %v1628, %v2131
    %v2173 = vsel %vm235, %v1633, %v2133
    %v2174 = vsel %vm133, %v2170, %v2143
    %v2175 = vsel %vm133, %v2171, %v2145
    %v2176 = vsel %vm133, %v2172, %v2147
    %v2177 = vsel %vm133, %v2173, %v2149
    %vm2178 = vcmask 195584
    %v2179 = vsel %vm2178, %v2174, %v2159
    %v2180 = vsel %vm2178, %v2175, %v2161
    %v2181 = vsel %vm2178, %v2176, %v2163
    %v2182 = vsel %vm2178, %v2177, %v2165
    %v2183 = vadd.f32 %v213, %v2179
    %v2184 = vadd.f32 %v218, %v2180
    %v2185 = vadd.f32 %v223, %v2181
    %v2186 = vadd.f32 %v228, %v2182
    %v2187 = vsel %vm321, %v2183, 0.0
    %2188 = vadd.xlane.f32.xlu0 %v2187
    %v2189 = vpop.xlane.xlu0 %2188
    %v2190 = vsel %vm321, %v2184, 0.0
    %2191 = vadd.xlane.f32.xlu0 %v2190
    %v2192 = vpop.xlane.xlu0 %2191
    %v2193 = vsel %vm321, %v2185, 0.0
    %2194 = vadd.xlane.f32.xlu0 %v2193
    %v2195 = vpop.xlane.xlu0 %2194
    %v2196 = vsel %vm321, %v2186, 0.0
    %2197 = vadd.xlane.f32.xlu0 %v2196
    %v2198 = vpop.xlane.xlu0 %2197
    %v2199 = vrcp.pop 32.0
    %v2200 = vmul.f32 %v2189, %v2199
    %v2201 = vmul.f32 %v2192, %v2199
    %v2202 = vmul.f32 %v2195, %v2199
    %v2203 = vmul.f32 %v2198, %v2199
    %v2204 = vsub.f32 %v2183, %v2200
    %v2205 = vsub.f32 %v2184, %v2201
    %v2206 = vsub.f32 %v2185, %v2202
    %v2207 = vsub.f32 %v2186, %v2203
    %v2208 = vmul.f32 %v2204, %v2204
    %v2209 = vmul.f32 %v2205, %v2205
    %v2210 = vmul.f32 %v2206, %v2206
    %v2211 = vmul.f32 %v2207, %v2207
    %v2212 = vsel %vm321, %v2208, 0.0
    %2213 = vadd.xlane.f32.xlu0 %v2212
    %v2214 = vpop.xlane.xlu0 %2213
    %v2215 = vsel %vm321, %v2209, 0.0
    %2216 = vadd.xlane.f32.xlu0 %v2215
    %v2217 = vpop.xlane.xlu0 %2216
    %v2218 = vsel %vm321, %v2210, 0.0
    %2219 = vadd.xlane.f32.xlu0 %v2218
    %v2220 = vpop.xlane.xlu0 %2219
    %v2221 = vsel %vm321, %v2211, 0.0
    %2222 = vadd.xlane.f32.xlu0 %v2221
    %v2223 = vpop.xlane.xlu0 %2222
    %v2224 = vmul.f32 %v2214, %v2199
    %v2225 = vmul.f32 %v2217, %v2199
    %v2226 = vmul.f32 %v2220, %v2199
    %v2227 = vmul.f32 %v2223, %v2199
    %v2228 = vadd.f32 %v2224, 1e-05
    %v2229 = vadd.f32 %v2225, 1e-05
    %v2230 = vadd.f32 %v2226, 1e-05
    %v2231 = vadd.f32 %v2227, 1e-05
    %v2232 = vrsqrt.pop %v2228
    %v2233 = vrsqrt.pop %v2229
    %v2234 = vrsqrt.pop %v2230
    %v2235 = vrsqrt.pop %v2231
    %v2236 = vmul.f32 %v2204, %v2232
    %v2237 = vmul.f32 %v2205, %v2233
    %v2238 = vmul.f32 %v2206, %v2234
    %v2239 = vmul.f32 %v2207, %v2235
    %v2240 = vlaneseq
    %v2241 = vshrl.u32 %v2240, 7
    %v2242 = vsub.s32 0, %v2241
    %v2243 = vrot.slane %v122, %v2242
    %v2244 = vmul.f32 %v2236, %v2243
    %v2245 = vmul.f32 %v2237, %v2243
    %v2246 = vmul.f32 %v2238, %v2243
    %v2247 = vmul.f32 %v2239, %v2243
    %v2248 = vlaneseq
    %v2249 = vshrl.u32 %v2248, 7
    %v2250 = vsub.s32 0, %v2249
    %v2251 = vrot.slane %v123, %v2250
    %v2252 = vadd.f32 %v2244, %v2251
    %v2253 = vadd.f32 %v2245, %v2251
    %v2254 = vadd.f32 %v2246, %v2251
    %v2255 = vadd.f32 %v2247, %v2251
    %v2256 = vlaneseq
    %v2257 = vshrl.u32 %v2256, 7
    %v2258 = vsub.s32 0, %v2257
    %v2259 = vrot.slane %v124, %v2258
    %v2261 = vsel %vm321, %v2252, 0
    %v2264 = vsel %vm321, %v2253, 0
    %v2267 = vsel %vm321, %v2254, 0
    %v2270 = vsel %vm321, %v2255, 0
    %2272 = vmatprep.subr.mxu0 0.0
    %2273 = vmatpush1.msra.mxu0 %v99
    %2274 = vmatprep.subr.mxu0 0.0
    %2275 = vmatpush1.msra.mxu0 %v100
    %2276 = vmatprep.subr.mxu0 0.0
    %2277 = vmatpush1.msra.mxu0 %v101
    %2278 = vmatprep.subr.mxu0 0.0
    %2279 = vmatpush1.msra.mxu0 %v102
    %2280 = vmatprep.subr.mxu0 0.0
    %2281 = vmatpush1.msra.mxu0 0.0
    %2282 = vmatprep.subr.mxu0 0.0
    %2283 = vmatpush1.msra.mxu0 0.0
    %2284 = vmatprep.subr.mxu0 0.0
    %2285 = vmatpush1.msra.mxu0 0.0
    %2286 = vmatprep.subr.mxu0 0.0
    %2287 = vmatpush1.msra.mxu0 0.0
    %2288 = vmatprep.subr.mxu0 0.0
    %2289 = vmatpush1.msra.mxu0 0.0
    %2290 = vmatprep.subr.mxu0 0.0
    %2291 = vmatpush1.msra.mxu0 0.0
    %2292 = vmatprep.subr.mxu0 0.0
    %2293 = vmatpush1.msra.mxu0 0.0
    %2294 = vmatprep.subr.mxu0 0.0
    %2295 = vmatpush1.msra.mxu0 0.0
    %2296 = vmatprep.subr.mxu0 0.0
    %2297 = vmatpush1.msra.mxu0 0.0
    %2298 = vmatprep.subr.mxu0 0.0
    %2299 = vmatpush1.msra.mxu0 0.0
    %2300 = vmatprep.subr.mxu0 0.0
    %2301 = vmatpush1.msra.mxu0 0.0
    %2302 = vmatprep.subr.mxu0 0.0
    %2303 = vmatpush1.msra.mxu0 0.0
    %2304 = vmatprep.subr.mxu0 0.0
    %2305 = vmatpush1.msra.mxu0 0.0
    %2306 = vmatprep.subr.mxu0 0.0
    %2307 = vmatpush1.msra.mxu0 0.0
    %2308 = vmatprep.subr.mxu0 0.0
    %2309 = vmatpush1.msra.mxu0 0.0
    %2310 = vmatprep.subr.mxu0 0.0
    %2311 = vmatpush1.msra.mxu0 0.0
    %2312 = vmatprep.subr.mxu0 0.0
    %2313 = vmatpush1.msra.mxu0 0.0
    %2314 = vmatprep.subr.mxu0 0.0
    %2315 = vmatpush1.msra.mxu0 0.0
    %2316 = vmatprep.subr.mxu0 0.0
    %2317 = vmatpush1.msra.mxu0 0.0
    %2318 = vmatprep.subr.mxu0 0.0
    %2319 = vmatpush1.msra.mxu0 0.0
    %2320 = vmatprep.subr.mxu0 0.0
    %2321 = vmatpush1.msra.mxu0 0.0
    %2322 = vmatprep.subr.mxu0 0.0
    %2323 = vmatpush1.msra.mxu0 0.0
    %2324 = vmatprep.subr.mxu0 0.0
    %2325 = vmatpush1.msra.mxu0 0.0
    %2326 = vmatprep.subr.mxu0 0.0
    %2327 = vmatpush1.msra.mxu0 0.0
    %2328 = vmatprep.subr.mxu0 0.0
    %2329 = vmatpush1.msra.mxu0 0.0
    %2330 = vmatprep.subr.mxu0 0.0
    %2331 = vmatpush1.msra.mxu0 0.0
    %2332 = vmatprep.subr.mxu0 0.0
    %2333 = vmatpush1.msra.mxu0 0.0
    %2334 = vmatprep.subr.mxu0 0.0
    %2335 = vmatpush1.msra.mxu0 0.0
    %2336 = vmatprep.mubr.f32.mxu0 0.0
    %2337 = vmatmul.mubr.f32.gmra.mrb[0].mxu0 %v2261
    %v2338 = vpop.f32.mrb[0].mxu0
    %v2339 = vadd.f32 %v2259, %v2338
    %v2340 = vpop.f32.mrb[0].mxu0
    %2341 = vmatprep.mubr.f32.mxu0 0.0
    %2342 = vmatmul.mubr.f32.gmra.mrb[0].mxu0 %v2264
    %v2343 = vpop.f32.mrb[0].mxu0
    %v2344 = vadd.f32 %v2259, %v2343
    %v2345 = vpop.f32.mrb[0].mxu0
    %2346 = vmatprep.mubr.f32.mxu0 0.0
    %2347 = vmatmul.mubr.f32.gmra.mrb[0].mxu0 %v2267
    %v2348 = vpop.f32.mrb[0].mxu0
    %v2349 = vadd.f32 %v2259, %v2348
    %v2350 = vpop.f32.mrb[0].mxu0
    %2351 = vmatprep.mubr.f32.mxu0 0.0
    %2352 = vmatmul.mubr.f32.gmra.mrb[0].mxu0 %v2270
    %v2353 = vpop.f32.mrb[0].mxu0
    %v2354 = vadd.f32 %v2259, %v2353
    %v2355 = vpop.f32.mrb[0].mxu0
    %2356 = vdwg.mxu0
    %v2357 = vmax.f32 %v2339, 0.0
    %v2358 = vmax.f32 %v2344, 0.0
    %v2359 = vmax.f32 %v2349, 0.0
    %v2360 = vmax.f32 %v2354, 0.0
    %v2361 = vlaneseq
    %v2362 = vshrl.u32 %v2361, 7
    %v2363 = vsub.s32 0, %v2362
    %v2364 = vrot.slane %v125, %v2363
    %vm2365 = vcmask 523264
    %v2367 = vsel %vm2365, %v2357, 0
    %v2370 = vsel %vm2365, %v2358, 0
    %v2373 = vsel %vm2365, %v2359, 0
    %v2376 = vsel %vm2365, %v2360, 0
    %2378 = vmatprep.subr.mxu0 0.0
    %2379 = vmatpush1.msra.mxu0 %v104
    %2380 = vmatprep.subr.mxu0 0.0
    %2381 = vmatpush1.msra.mxu0 %v105
    %2382 = vmatprep.subr.mxu0 0.0
    %2383 = vmatpush1.msra.mxu0 %v106
    %2384 = vmatprep.subr.mxu0 0.0
    %2385 = vmatpush1.msra.mxu0 %v107
    %2386 = vmatprep.subr.mxu0 0.0
    %2387 = vmatpush1.msra.mxu0 %v108
    %2388 = vmatprep.subr.mxu0 0.0
    %2389 = vmatpush1.msra.mxu0 %v109
    %2390 = vmatprep.subr.mxu0 0.0
    %2391 = vmatpush1.msra.mxu0 %v110
    %2392 = vmatprep.subr.mxu0 0.0
    %2393 = vmatpush1.msra.mxu0 %v111
    %2394 = vmatprep.subr.mxu0 0.0
    %2395 = vmatpush1.msra.mxu0 0.0
    %2396 = vmatprep.subr.mxu0 0.0
    %2397 = vmatpush1.msra.mxu0 0.0
    %2398 = vmatprep.subr.mxu0 0.0
    %2399 = vmatpush1.msra.mxu0 0.0
    %2400 = vmatprep.subr.mxu0 0.0
    %2401 = vmatpush1.msra.mxu0 0.0
    %2402 = vmatprep.subr.mxu0 0.0
    %2403 = vmatpush1.msra.mxu0 0.0
    %2404 = vmatprep.subr.mxu0 0.0
    %2405 = vmatpush1.msra.mxu0 0.0
    %2406 = vmatprep.subr.mxu0 0.0
    %2407 = vmatpush1.msra.mxu0 0.0
    %2408 = vmatprep.subr.mxu0 0.0
    %2409 = vmatpush1.msra.mxu0 0.0
    %2410 = vmatprep.subr.mxu0 0.0
    %2411 = vmatpush1.msra.mxu0 0.0
    %2412 = vmatprep.subr.mxu0 0.0
    %2413 = vmatpush1.msra.mxu0 0.0
    %2414 = vmatprep.subr.mxu0 0.0
    %2415 = vmatpush1.msra.mxu0 0.0
    %2416 = vmatprep.subr.mxu0 0.0
    %2417 = vmatpush1.msra.mxu0 0.0
    %2418 = vmatprep.subr.mxu0 0.0
    %2419 = vmatpush1.msra.mxu0 0.0
    %2420 = vmatprep.subr.mxu0 0.0
    %2421 = vmatpush1.msra.mxu0 0.0
    %2422 = vmatprep.subr.mxu0 0.0
    %2423 = vmatpush1.msra.mxu0 0.0
    %2424 = vmatprep.subr.mxu0 0.0
    %2425 = vmatpush1.msra.mxu0 0.0
    %2426 = vmatprep.subr.mxu0 0.0
    %2427 = vmatpush1.msra.mxu0 0.0
    %2428 = vmatprep.subr.mxu0 0.0
    %2429 = vmatpush1.msra.mxu0 0.0
    %2430 = vmatprep.subr.mxu0 0.0
    %2431 = vmatpush1.msra.mxu0 0.0
    %2432 = vmatprep.subr.mxu0 0.0
    %2433 = vmatpush1.msra.mxu0 0.0
    %2434 = vmatprep.subr.mxu0 0.0
    %2435 = vmatpush1.msra.mxu0 0.0
    %2436 = vmatprep.subr.mxu0 0.0
    %2437 = vmatpush1.msra.mxu0 0.0
    %2438 = vmatprep.subr.mxu0 0.0
    %2439 = vmatpush1.msra.mxu0 0.0
    %2440 = vmatprep.subr.mxu0 0.0
    %2441 = vmatpush1.msra.mxu0 0.0
    %2442 = vmatprep.mubr.f32.mxu0 0.0
    %2443 = vmatmul.mubr.f32.gmra.mrb[0].mxu0 %v2367
    %v2444 = vpop.f32.mrb[0].mxu0
    %v2445 = vadd.f32 %v2364, %v2444
    %v2446 = vpop.f32.mrb[0].mxu0
    %2447 = vmatprep.mubr.f32.mxu0 0.0
    %2448 = vmatmul.mubr.f32.gmra.mrb[0].mxu0 %v2370
    %v2449 = vpop.f32.mrb[0].mxu0
    %v2450 = vadd.f32 %v2364, %v2449
    %v2451 = vpop.f32.mrb[0].mxu0
    %2452 = vmatprep.mubr.f32.mxu0 0.0
    %2453 = vmatmul.mubr.f32.gmra.mrb[0].mxu0 %v2373
    %v2454 = vpop.f32.mrb[0].mxu0
    %v2455 = vadd.f32 %v2364, %v2454
    %v2456 = vpop.f32.mrb[0].mxu0
    %2457 = vmatprep.mubr.f32.mxu0 0.0
    %2458 = vmatmul.mubr.f32.gmra.mrb[0].mxu0 %v2376
    %v2459 = vpop.f32.mrb[0].mxu0
    %v2460 = vadd.f32 %v2364, %v2459
    %v2461 = vpop.f32.mrb[0].mxu0
    %2462 = vdwg.mxu0
    %v2463 = vadd.f32 %v2252, %v2445
    %v2464 = vadd.f32 %v2253, %v2450
    %v2465 = vadd.f32 %v2254, %v2455
    %v2466 = vadd.f32 %v2255, %v2460
    %v2467 = vsel %vm321, %v2463, 0.0
    %2468 = vadd.xlane.f32.xlu0 %v2467
    %v2469 = vpop.xlane.xlu0 %2468
    %v2470 = vsel %vm321, %v2464, 0.0
    %2471 = vadd.xlane.f32.xlu0 %v2470
    %v2472 = vpop.xlane.xlu0 %2471
    %v2473 = vsel %vm321, %v2465, 0.0
    %2474 = vadd.xlane.f32.xlu0 %v2473
    %v2475 = vpop.xlane.xlu0 %2474
    %v2476 = vsel %vm321, %v2466, 0.0
    %2477 = vadd.xlane.f32.xlu0 %v2476
    %v2478 = vpop.xlane.xlu0 %2477
    %v2479 = vmul.f32 %v2469, %v2199
    %v2480 = vmul.f32 %v2472, %v2199
    %v2481 = vmul.f32 %v2475, %v2199
    %v2482 = vmul.f32 %v2478, %v2199
    %v2483 = vsub.f32 %v2463, %v2479
    %v2484 = vsub.f32 %v2464, %v2480
    %v2485 = vsub.f32 %v2465, %v2481
    %v2486 = vsub.f32 %v2466, %v2482
    %v2487 = vmul.f32 %v2483, %v2483
    %v2488 = vmul.f32 %v2484, %v2484
    %v2489 = vmul.f32 %v2485, %v2485
    %v2490 = vmul.f32 %v2486, %v2486
    %v2491 = vsel %vm321, %v2487, 0.0
    %2492 = vadd.xlane.f32.xlu0 %v2491
    %v2493 = vpop.xlane.xlu0 %2492
    %v2494 = vsel %vm321, %v2488, 0.0
    %2495 = vadd.xlane.f32.xlu0 %v2494
    %v2496 = vpop.xlane.xlu0 %2495
    %v2497 = vsel %vm321, %v2489, 0.0
    %2498 = vadd.xlane.f32.xlu0 %v2497
    %v2499 = vpop.xlane.xlu0 %2498
    %v2500 = vsel %vm321, %v2490, 0.0
    %2501 = vadd.xlane.f32.xlu0 %v2500
    %v2502 = vpop.xlane.xlu0 %2501
    %v2503 = vmul.f32 %v2493, %v2199
    %v2504 = vmul.f32 %v2496, %v2199
    %v2505 = vmul.f32 %v2499, %v2199
    %v2506 = vmul.f32 %v2502, %v2199
    %v2507 = vadd.f32 %v2503, 1e-05
    %v2508 = vadd.f32 %v2504, 1e-05
    %v2509 = vadd.f32 %v2505, 1e-05
    %v2510 = vadd.f32 %v2506, 1e-05
    %v2511 = vrsqrt.pop %v2507
    %v2512 = vrsqrt.pop %v2508
    %v2513 = vrsqrt.pop %v2509
    %v2514 = vrsqrt.pop %v2510
    %v2515 = vmul.f32 %v2483, %v2511
    %v2516 = vmul.f32 %v2484, %v2512
    %v2517 = vmul.f32 %v2485, %v2513
    %v2518 = vmul.f32 %v2486, %v2514
    %v2519 = vlaneseq
    %v2520 = vshrl.u32 %v2519, 7
    %v2521 = vsub.s32 0, %v2520
    %v2522 = vrot.slane %v126, %v2521
    %v2523 = vmul.f32 %v2515, %v2522
    %v2524 = vmul.f32 %v2516, %v2522
    %v2525 = vmul.f32 %v2517, %v2522
    %v2526 = vmul.f32 %v2518, %v2522
    %v2527 = vlaneseq
    %v2528 = vshrl.u32 %v2527, 7
    %v2529 = vsub.s32 0, %v2528
    %v2530 = vrot.slane %v127, %v2529
    %v2531 = vadd.f32 %v2523, %v2530
    %v2532 = vadd.f32 %v2524, %v2530
    %v2533 = vadd.f32 %v2525, %v2530
    %v2534 = vadd.f32 %v2526, %v2530
    %v2535 = vmax.f32 %v2531, 0.0
    %v2536 = vmax.f32 %v2532, 0.0
    %v2537 = vmax.f32 %v2533, 0.0
    %v2538 = vmax.f32 %v2534, 0.0
    %v2539 = vlaneseq
    %v2540 = vshrl.u32 %v2539, 7
    %v2541 = vsub.s32 0, %v2540
    %v2542 = vrot.slane %v128, %v2541
    %v2544 = vsel %vm321, %v2535, 0
    %v2547 = vsel %vm321, %v2536, 0
    %v2550 = vsel %vm321, %v2537, 0
    %v2553 = vsel %vm321, %v2538, 0
    %2555 = vmatprep.subr.mxu0 0.0
    %2556 = vmatpush1.msra.mxu0 %v113
    %2557 = vmatprep.subr.mxu0 0.0
    %2558 = vmatpush1.msra.mxu0 %v114
    %2559 = vmatprep.subr.mxu0 0.0
    %2560 = vmatpush1.msra.mxu0 %v115
    %2561 = vmatprep.subr.mxu0 0.0
    %2562 = vmatpush1.msra.mxu0 %v116
    %2563 = vmatprep.subr.mxu0 0.0
    %2564 = vmatpush1.msra.mxu0 0.0
    %2565 = vmatprep.subr.mxu0 0.0
    %2566 = vmatpush1.msra.mxu0 0.0
    %2567 = vmatprep.subr.mxu0 0.0
    %2568 = vmatpush1.msra.mxu0 0.0
    %2569 = vmatprep.subr.mxu0 0.0
    %2570 = vmatpush1.msra.mxu0 0.0
    %2571 = vmatprep.subr.mxu0 0.0
    %2572 = vmatpush1.msra.mxu0 0.0
    %2573 = vmatprep.subr.mxu0 0.0
    %2574 = vmatpush1.msra.mxu0 0.0
    %2575 = vmatprep.subr.mxu0 0.0
    %2576 = vmatpush1.msra.mxu0 0.0
    %2577 = vmatprep.subr.mxu0 0.0
    %2578 = vmatpush1.msra.mxu0 0.0
    %2579 = vmatprep.subr.mxu0 0.0
    %2580 = vmatpush1.msra.mxu0 0.0
    %2581 = vmatprep.subr.mxu0 0.0
    %2582 = vmatpush1.msra.mxu0 0.0
    %2583 = vmatprep.subr.mxu0 0.0
    %2584 = vmatpush1.msra.mxu0 0.0
    %2585 = vmatprep.subr.mxu0 0.0
    %2586 = vmatpush1.msra.mxu0 0.0
    %2587 = vmatprep.subr.mxu0 0.0
    %2588 = vmatpush1.msra.mxu0 0.0
    %2589 = vmatprep.subr.mxu0 0.0
    %2590 = vmatpush1.msra.mxu0 0.0
    %2591 = vmatprep.subr.mxu0 0.0
    %2592 = vmatpush1.msra.mxu0 0.0
    %2593 = vmatprep.subr.mxu0 0.0
    %2594 = vmatpush1.msra.mxu0 0.0
    %2595 = vmatprep.subr.mxu0 0.0
    %2596 = vmatpush1.msra.mxu0 0.0
    %2597 = vmatprep.subr.mxu0 0.0
    %2598 = vmatpush1.msra.mxu0 0.0
    %2599 = vmatprep.subr.mxu0 0.0
    %2600 = vmatpush1.msra.mxu0 0.0
    %2601 = vmatprep.subr.mxu0 0.0
    %2602 = vmatpush1.msra.mxu0 0.0
    %2603 = vmatprep.subr.mxu0 0.0
    %2604 = vmatpush1.msra.mxu0 0.0
    %2605 = vmatprep.subr.mxu0 0.0
    %2606 = vmatpush1.msra.mxu0 0.0
    %2607 = vmatprep.subr.mxu0 0.0
    %2608 = vmatpush1.msra.mxu0 0.0
    %2609 = vmatprep.subr.mxu0 0.0
    %2610 = vmatpush1.msra.mxu0 0.0
    %2611 = vmatprep.subr.mxu0 0.0
    %2612 = vmatpush1.msra.mxu0 0.0
    %2613 = vmatprep.subr.mxu0 0.0
    %2614 = vmatpush1.msra.mxu0 0.0
    %2615 = vmatprep.subr.mxu0 0.0
    %2616 = vmatpush1.msra.mxu0 0.0
    %2617 = vmatprep.subr.mxu0 0.0
    %2618 = vmatpush1.msra.mxu0 0.0
    %2619 = vmatprep.mubr.f32.mxu0 0.0
    %2620 = vmatmul.mubr.f32.gmra.mrb[0].mxu0 %v2544
    %v2621 = vpop.f32.mrb[0].mxu0
    %v2622 = vadd.f32 %v2542, %v2621
    %v2623 = vpop.f32.mrb[0].mxu0
    %2624 = vmatprep.mubr.f32.mxu0 0.0
    %2625 = vmatmul.mubr.f32.gmra.mrb[0].mxu0 %v2547
    %v2626 = vpop.f32.mrb[0].mxu0
    %v2627 = vadd.f32 %v2542, %v2626
    %v2628 = vpop.f32.mrb[0].mxu0
    %2629 = vmatprep.mubr.f32.mxu0 0.0
    %2630 = vmatmul.mubr.f32.gmra.mrb[0].mxu0 %v2550
    %v2631 = vpop.f32.mrb[0].mxu0
    %v2632 = vadd.f32 %v2542, %v2631
    %v2633 = vpop.f32.mrb[0].mxu0
    %2634 = vmatprep.mubr.f32.mxu0 0.0
    %2635 = vmatmul.mubr.f32.gmra.mrb[0].mxu0 %v2553
    %v2636 = vpop.f32.mrb[0].mxu0
    %v2637 = vadd.f32 %v2542, %v2636
    %v2638 = vpop.f32.mrb[0].mxu0
    %2639 = vdwg.mxu0
    %2640 = vst [vmem:[#allocation10] sm:$0xff] %v2622
    %2641 = vst [vmem:[#allocation10 + $0x8] sm:$0xff] %v2627
    %2642 = vst [vmem:[#allocation10 + $0x10] sm:$0xff] %v2632
    %2643 = vst [vmem:[#allocation10 + $0x18] sm:$0xff] %v2637
    // Predicated region
    $region34: #{tpu_custom_call.1} parent=1 // pred_check
      _
    $region35: #{tpu_custom_call.1} parent=1 // pred_check_branch
      %2645 = sbr.rel (0) target = $region37
    $region36: #{tpu_custom_call.1} parent=1 // pred_region
      %s2647 = ssub.s32 512, 512
      %2648 = vsyncadd [#allocation4], %s2647
      %s2649 = sshll.u32 [#allocation10], 4
      %s2650 = int_to_ptr.vmem [resolvable:$true] %s2649
      %2655 = dma.vmem_to_hbm [thread:$0]  %s2650, 512, %s4, [#allocation4], 128, 128, 8
    $region37: #{tpu_custom_call.1} parent=1 // pred_fallthru
      _
    // Predicated region
    $region38: #{tpu_custom_call.1} parent=1 // pred_check
      _
    $region39: #{tpu_custom_call.1} parent=1 // pred_check_branch
      %2657 = sbr.rel (0) target = $region41
    $region40: #{tpu_custom_call.1} parent=1 // pred_region
      %2658 = dma.done [#allocation4], 512
    $region41: #{tpu_custom_call.1} parent=1 // pred_fallthru
      _
    %2659 = vsyncpa [#allocation3], 1
    %2660 = vsyncpa [#allocation6], 1
    %2661 = vsyncpa [#allocation9], 1
    %2662 = vsyncpa [#allocation4], 1

</llo_original>
